<compile_context>
chip_gen: v6e
topology: v6e:2x2x1
jax: 0.10.0
libtpu: 0.0.40
codegen_flags: <defaults>
</compile_context>

<pallas_src>
import jax
import jax.numpy as jnp
from jax.experimental import pallas as pl
from jax.experimental.pallas import tpu as pltpu


# ------------------------- Pallas kernel -------------------------

def _cbam_kernel(x_ref, w1_ref, w2_ref, amax_ref, aavg_ref, o_ref):
    x = x_ref[...]                                              # (HW, C) f32

    # ---- channel attention: shared-MLP(avg) + shared-MLP(max), fused ----
    avg = jnp.mean(x, axis=0, keepdims=True)                    # (1, C)
    mx = jnp.max(x, axis=0, keepdims=True)                      # (1, C)
    h = (jnp.maximum(jnp.dot(avg, w1_ref[...],
                             preferred_element_type=jnp.float32), 0.0)
         + jnp.maximum(jnp.dot(mx, w1_ref[...],
                               preferred_element_type=jnp.float32), 0.0))
    c_gate = jax.nn.sigmoid(jnp.dot(h, w2_ref[...],
                                    preferred_element_type=jnp.float32))  # (1, C)
    y1 = x * c_gate                                             # (HW, C), stays in VMEM

    # ---- spatial attention: per-pixel channel max / mean (lane reductions) ----
    s_max = jnp.max(y1, axis=1, keepdims=True)                  # (HW, 1)
    s_avg = jnp.mean(y1, axis=1, keepdims=True)                 # (HW, 1)

    # 7x7 / pad-3 conv over the (max, mean) maps as two MXU matmuls against
    # host-precomputed dense conv matrices (border handling already folded in).
    conv = (jnp.dot(amax_ref[...], s_max, preferred_element_type=jnp.float32)
            + jnp.dot(aavg_ref[...], s_avg, preferred_element_type=jnp.float32))
    o_ref[...] = y1 * jax.nn.sigmoid(conv)                      # single HBM write


# ------------------------- wrapper -------------------------

def _conv_matrices(conv_w, H, W):
    """Dense (HW, HW) matrices equivalent to a 7x7, stride-1, pad-3 conv.

    conv_w: (2, 7, 7); conv_w[0] applies to the per-pixel channel max map,
    conv_w[1] to the per-pixel channel mean map (PyTorch cat((max, avg), 1))."""
    HW = H * W
    p = jnp.arange(HW, dtype=jnp.int32)
    ph = (p // W)[:, None, None]                                # (HW, 1, 1)
    pw = (p % W)[:, None, None]
    kh = jnp.arange(7, dtype=jnp.int32)[None, :, None]          # (1, 7, 1)
    kw = jnp.arange(7, dtype=jnp.int32)[None, None, :]          # (1, 1, 7)
    qh = ph + kh - 3                                            # (HW, 7, 1)
    qw = pw + kw - 3                                            # (HW, 1, 7)
    valid = (qh >= 0) & (qh < H) & (qw >= 0) & (qw < W)         # (HW, 7, 7)
    qidx = qh * W + qw                                          # (HW, 7, 7)
    onehot = ((qidx[..., None] == jnp.arange(HW, dtype=jnp.int32))
              & valid[..., None]).astype(jnp.float32)           # (HW, 7, 7, HW)
    a_max = jnp.einsum('phwq,hw->pq', onehot, conv_w[0].astype(jnp.float32))
    a_avg = jnp.einsum('phwq,hw->pq', onehot, conv_w[1].astype(jnp.float32))
    return a_max, a_avg                                         # (HW, HW) each


def cbam_pallas(x_nchw, w1, w2, conv_w):
    """x_nchw: (B, C, H, W); w1: (C, C//r); w2: (C//r, C); conv_w: (2, 7, 7)."""
    B, C, H, W = x_nchw.shape
    HW = H * W
    Cr = w1.shape[1]

    # channels-last, flattened spatial: C=128 sits on the 128-lane axis.
    x = jnp.transpose(x_nchw, (0, 2, 3, 1)).reshape(B, HW, C).astype(jnp.float32)
    a_max, a_avg = _conv_matrices(conv_w, H, W)

    out = pl.pallas_call(
        _cbam_kernel,
        out_shape=jax.ShapeDtypeStruct((B, HW, C), jnp.float32),
        grid=(B,),
        in_specs=[
            pl.BlockSpec((None, HW, C), lambda b: (b, 0, 0)),    # x (per image)
            pl.BlockSpec((C, Cr), lambda b: (0, 0)),             # mlp W1 (held in VMEM)
            pl.BlockSpec((Cr, C), lambda b: (0, 0)),             # mlp W2
            pl.BlockSpec((HW, HW), lambda b: (0, 0)),            # A_max (held in VMEM)
            pl.BlockSpec((HW, HW), lambda b: (0, 0)),            # A_avg
        ],
        out_specs=pl.BlockSpec((None, HW, C), lambda b: (b, 0, 0)),
        compiler_params=pltpu.CompilerParams(
            dimension_semantics=("parallel",)),
    )(x, w1.astype(jnp.float32), w2.astype(jnp.float32), a_max, a_avg)

    return jnp.transpose(out.reshape(B, H, W, C), (0, 3, 1, 2))


# ------------------------- pure-JAX reference -------------------------

def cbam_reference(x, w1, w2, conv_w):
    B, C, H, W = x.shape
    avg = jnp.mean(x, axis=(2, 3))                              # (B, C)
    mx = jnp.max(x, axis=(2, 3))                                # (B, C)

    def mlp(v):
        return jnp.maximum(v @ w1, 0.0) @ w2

    c_gate = jax.nn.sigmoid(mlp(avg) + mlp(mx))                 # (B, C)
    y1 = x * c_gate[:, :, None, None]
    s_avg = jnp.mean(y1, axis=1, keepdims=True)
    s_max = jnp.max(y1, axis=1, keepdims=True)
    s_in = jnp.concatenate([s_max, s_avg], axis=1)              # (B, 2, H, W)
    conv = jax.lax.conv_general_dilated(
        s_in, conv_w[None],                                     # OIHW (1,2,7,7)
        window_strides=(1, 1), padding=((3, 3), (3, 3)),
        dimension_numbers=("NCHW", "OIHW", "NCHW"))
    return jax.nn.sigmoid(conv) * y1


# ------------------------- main -------------------------

if __name__ == "__main__":
    B, C, H, W = 2, 128, 16, 16          # channel=128, reduction=16 -> hidden=8
    reduction = 16
    Cr = C // reduction

    key = jax.random.PRNGKey(0)
    kx, k1, k2, k3 = jax.random.split(key, 4)
    x = jax.random.normal(kx, (B, C, H, W), jnp.float32)
    w1 = 0.1 * jax.random.normal(k1, (C, Cr), jnp.float32)
    w2 = 0.1 * jax.random.normal(k2, (Cr, C), jnp.float32)
    conv_w = 0.1 * jax.random.normal(k3, (2, 7, 7), jnp.float32)

    cbam_jit = jax.jit(cbam_pallas)
    out = jax.block_until_ready(cbam_jit(x, w1, w2, conv_w))
    ref = jax.block_until_ready(cbam_reference(x, w1, w2, conv_w))

    assert out.shape == (B, C, H, W), out.shape
    assert bool(jnp.all(jnp.isfinite(out)))
    max_err = float(jnp.max(jnp.abs(out - ref)))
    assert bool(jnp.allclose(out, ref, atol=1e-4, rtol=1e-4)), max_err
    print("KERNEL_OK")
</pallas_src>

<mosaic_0001>
module attributes {stable_mosaic.version = 11 : i64} {
  func.func @_cbam_kernel(%arg0: i32, %arg1: memref<1x256x128xf32, #tpu.memory_space<vmem>>, %arg2: memref<128x8xf32, #tpu.memory_space<vmem>>, %arg3: memref<8x128xf32, #tpu.memory_space<vmem>>, %arg4: memref<256x256xf32, #tpu.memory_space<vmem>>, %arg5: memref<256x256xf32, #tpu.memory_space<vmem>>, %arg6: memref<1x256x128xf32, #tpu.memory_space<vmem>>) attributes {dimension_semantics = [#tpu.dimension_semantics<parallel>], iteration_bounds = array<i64: 2>, scalar_prefetch = 0 : i64, scratch_operands = 0 : i64, tpu.core_type = #tpu.core_type<tc>, window_params = [{transform_indices = @transform_0, window_bounds = array<i64: 1, 256, 128>}, {pipeline_mode = #tpu.pipeline_mode<synchronous>, transform_indices = @transform_1, window_bounds = array<i64: 128, 8>}, {pipeline_mode = #tpu.pipeline_mode<synchronous>, transform_indices = @transform_2, window_bounds = array<i64: 8, 128>}, {pipeline_mode = #tpu.pipeline_mode<synchronous>, transform_indices = @transform_3, window_bounds = array<i64: 256, 256>}, {pipeline_mode = #tpu.pipeline_mode<synchronous>, transform_indices = @transform_4, window_bounds = array<i64: 256, 256>}, {transform_indices = @transform_5, window_bounds = array<i64: 1, 256, 128>}]} {
    %c0 = arith.constant 0 : index
    %c0_0 = arith.constant 0 : index
    %c0_1 = arith.constant 0 : index
    %0 = vector.load %arg1[%c0, %c0_0, %c0_1] : memref<1x256x128xf32, #tpu.memory_space<vmem>>, vector<1x256x128xf32>
    %1 = vector.shape_cast %0 : vector<1x256x128xf32> to vector<256x128xf32>
    %cst = arith.constant dense<0.000000e+00> : vector<128xf32>
    %2 = vector.multi_reduction <add>, %1, %cst [0] : vector<256x128xf32> to vector<128xf32>
    %3 = vector.shape_cast %2 : vector<128xf32> to vector<1x128xf32>
    %cst_2 = arith.constant 2.560000e+02 : f32
    %4 = vector.broadcast %cst_2 : f32 to vector<1x128xf32>
    %5 = arith.divf %3, %4 : vector<1x128xf32>
    %cst_3 = arith.constant dense<0xFF800000> : vector<128xf32>
    %6 = vector.multi_reduction <maximumf>, %1, %cst_3 [0] : vector<256x128xf32> to vector<128xf32>
    %7 = vector.shape_cast %6 : vector<128xf32> to vector<1x128xf32>
    %c0_4 = arith.constant 0 : index
    %c0_5 = arith.constant 0 : index
    %8 = vector.load %arg2[%c0_4, %c0_5] : memref<128x8xf32, #tpu.memory_space<vmem>>, vector<128x8xf32>
    %cst_6 = arith.constant dense<0.000000e+00> : vector<1x8xf32>
    %9 = tpu.matmul %5, %8, %cst_6 {dimension_numbers = #tpu.dot_dimension_numbers<[1], [0], [0], [1], [0, 0, 1, 1], [], []>} : vector<1x128xf32>, vector<128x8xf32>, vector<1x8xf32> -> vector<1x8xf32>
    %cst_7 = arith.constant 0.000000e+00 : f32
    %10 = vector.broadcast %cst_7 : f32 to vector<1x8xf32>
    %11 = arith.maximumf %9, %10 : vector<1x8xf32>
    %c0_8 = arith.constant 0 : index
    %c0_9 = arith.constant 0 : index
    %12 = vector.load %arg2[%c0_8, %c0_9] : memref<128x8xf32, #tpu.memory_space<vmem>>, vector<128x8xf32>
    %cst_10 = arith.constant dense<0.000000e+00> : vector<1x8xf32>
    %13 = tpu.matmul %7, %12, %cst_10 {dimension_numbers = #tpu.dot_dimension_numbers<[1], [0], [0], [1], [0, 0, 1, 1], [], []>} : vector<1x128xf32>, vector<128x8xf32>, vector<1x8xf32> -> vector<1x8xf32>
    %cst_11 = arith.constant 0.000000e+00 : f32
    %14 = vector.broadcast %cst_11 : f32 to vector<1x8xf32>
    %15 = arith.maximumf %13, %14 : vector<1x8xf32>
    %16 = arith.addf %11, %15 : vector<1x8xf32>
    %c0_12 = arith.constant 0 : index
    %c0_13 = arith.constant 0 : index
    %17 = vector.load %arg3[%c0_12, %c0_13] : memref<8x128xf32, #tpu.memory_space<vmem>>, vector<8x128xf32>
    %cst_14 = arith.constant dense<0.000000e+00> : vector<1x128xf32>
    %18 = tpu.matmul %16, %17, %cst_14 {dimension_numbers = #tpu.dot_dimension_numbers<[1], [0], [0], [1], [0, 0, 1, 1], [], []>} : vector<1x8xf32>, vector<8x128xf32>, vector<1x128xf32> -> vector<1x128xf32>
    %19 = arith.negf %18 : vector<1x128xf32>
    %20 = math.exp %19 : vector<1x128xf32>
    %cst_15 = arith.constant 1.000000e+00 : f32
    %21 = vector.broadcast %cst_15 : f32 to vector<1x128xf32>
    %22 = arith.addf %21, %20 : vector<1x128xf32>
    %23 = arith.divf %21, %22 : vector<1x128xf32>
    %24 = vector.broadcast %23 : vector<1x128xf32> to vector<256x128xf32>
    %25 = arith.mulf %1, %24 : vector<256x128xf32>
    %cst_16 = arith.constant dense<0xFF800000> : vector<256xf32>
    %26 = vector.multi_reduction <maximumf>, %25, %cst_16 [1] : vector<256x128xf32> to vector<256xf32>
    %27 = vector.shape_cast %26 : vector<256xf32> to vector<256x1xf32>
    %cst_17 = arith.constant dense<0.000000e+00> : vector<256xf32>
    %28 = vector.multi_reduction <add>, %25, %cst_17 [1] : vector<256x128xf32> to vector<256xf32>
    %29 = vector.shape_cast %28 : vector<256xf32> to vector<256x1xf32>
    %cst_18 = arith.constant 1.280000e+02 : f32
    %30 = vector.broadcast %cst_18 : f32 to vector<256x1xf32>
    %31 = arith.divf %29, %30 : vector<256x1xf32>
    %c0_19 = arith.constant 0 : index
    %c0_20 = arith.constant 0 : index
    %32 = vector.load %arg4[%c0_19, %c0_20] : memref<256x256xf32, #tpu.memory_space<vmem>>, vector<256x256xf32>
    %cst_21 = arith.constant dense<0.000000e+00> : vector<256x1xf32>
    %33 = tpu.matmul %32, %27, %cst_21 {dimension_numbers = #tpu.dot_dimension_numbers<[1], [0], [0], [1], [0, 0, 1, 1], [], []>} : vector<256x256xf32>, vector<256x1xf32>, vector<256x1xf32> -> vector<256x1xf32>
    %c0_22 = arith.constant 0 : index
    %c0_23 = arith.constant 0 : index
    %34 = vector.load %arg5[%c0_22, %c0_23] : memref<256x256xf32, #tpu.memory_space<vmem>>, vector<256x256xf32>
    %cst_24 = arith.constant dense<0.000000e+00> : vector<256x1xf32>
    %35 = tpu.matmul %34, %31, %cst_24 {dimension_numbers = #tpu.dot_dimension_numbers<[1], [0], [0], [1], [0, 0, 1, 1], [], []>} : vector<256x256xf32>, vector<256x1xf32>, vector<256x1xf32> -> vector<256x1xf32>
    %36 = arith.addf %33, %35 : vector<256x1xf32>
    %37 = arith.negf %36 : vector<256x1xf32>
    %38 = math.exp %37 : vector<256x1xf32>
    %cst_25 = arith.constant 1.000000e+00 : f32
    %39 = vector.broadcast %cst_25 : f32 to vector<256x1xf32>
    %40 = arith.addf %39, %38 : vector<256x1xf32>
    %41 = arith.divf %39, %40 : vector<256x1xf32>
    %42 = vector.broadcast %41 : vector<256x1xf32> to vector<256x128xf32>
    %43 = arith.mulf %25, %42 : vector<256x128xf32>
    %c0_26 = arith.constant 0 : index
    %c0_27 = arith.constant 0 : index
    %c0_28 = arith.constant 0 : index
    %44 = vector.load %arg6[%c0_26, %c0_27, %c0_28] : memref<1x256x128xf32, #tpu.memory_space<vmem>>, vector<1x256x128xf32>
    %45 = vector.shape_cast %44 : vector<1x256x128xf32> to vector<256x128xf32>
    %46 = vector.shape_cast %43 : vector<256x128xf32> to vector<1x256x128xf32>
    tpu.vector_store %arg6[%c0_26, %c0_27, %c0_28], %46 {strides = array<i32>} : memref<1x256x128xf32, #tpu.memory_space<vmem>>, vector<1x256x128xf32>,
    return
  }
  func.func @transform_0(%arg0: i32) -> (i32, i32, i32) {
    %c0_i32 = arith.constant 0 : i32
    %c0_i32_0 = arith.constant 0 : i32
    %c0_i32_1 = arith.constant 0 : i32
    return %arg0, %c0_i32, %c0_i32_0 : i32, i32, i32
  }
  func.func @transform_1(%arg0: i32) -> (i32, i32) {
    %c0_i32 = arith.constant 0 : i32
    %c0_i32_0 = arith.constant 0 : i32
    %c0_i32_1 = arith.constant 0 : i32
    return %c0_i32, %c0_i32_0 : i32, i32
  }
  func.func @transform_2(%arg0: i32) -> (i32, i32) {
    %c0_i32 = arith.constant 0 : i32
    %c0_i32_0 = arith.constant 0 : i32
    %c0_i32_1 = arith.constant 0 : i32
    return %c0_i32, %c0_i32_0 : i32, i32
  }
  func.func @transform_3(%arg0: i32) -> (i32, i32) {
    %c0_i32 = arith.constant 0 : i32
    %c0_i32_0 = arith.constant 0 : i32
    %c0_i32_1 = arith.constant 0 : i32
    return %c0_i32, %c0_i32_0 : i32, i32
  }
  func.func @transform_4(%arg0: i32) -> (i32, i32) {
    %c0_i32 = arith.constant 0 : i32
    %c0_i32_0 = arith.constant 0 : i32
    %c0_i32_1 = arith.constant 0 : i32
    return %c0_i32, %c0_i32_0 : i32, i32
  }
  func.func @transform_5(%arg0: i32) -> (i32, i32, i32) {
    %c0_i32 = arith.constant 0 : i32
    %c0_i32_0 = arith.constant 0 : i32
    %c0_i32_1 = arith.constant 0 : i32
    return %arg0, %c0_i32, %c0_i32_0 : i32, i32, i32
  }
}

</mosaic_0001>

<llo_original>
// kernel: cbam_pallas.1
$region0: #{cbam_pallas.1}
  #allocation0 [shape = 'u32[]', space=smem, size = 0x4, offset = 0x4, fixed_abs, tag = 'smem constant byte address 0x4 - core index']
  #allocation1 [shape = 'u32[144,128]{1,0:T(1,128)}', space=vmem, size = 0x12000, scoped, tag = 'internal scratch']
  %s0 = inlined_call_operand.vmem [shape: f32[2,256,128], index: 0, kind: input, shape index: {}]
  %s1 = inlined_call_operand.vmem [shape: f32[128,8], index: 1, kind: input, shape index: {}]
  %s2 = inlined_call_operand.vmem [shape: f32[8,128], index: 2, kind: input, shape index: {}]
  %s3 = inlined_call_operand.vmem [shape: f32[256,256], index: 3, kind: input, shape index: {}]
  %s4 = inlined_call_operand.vmem [shape: f32[256,256], index: 4, kind: input, shape index: {}]
  %s5 = inlined_call_operand.hbm [shape: f32[2,256,128], index: 5, kind: output, shape index: {}]
  %s6 = sld [smem:[#allocation0]]
  $region53: #{cbam_pallas.1} parent=0
    _
  %s8 = ssub.s32 1, %s6
  %s9 = scalar_select 0, %s8, %s6
  $region1: #{cbam_pallas.1} parent=0
    #allocation2 [shape = 'u8[262144]{0}', space=vmem, size = 0x40000, scoped, tag = 'output window, operand 0']
    #allocation3 [shape = 's32[2]{0}', space=sflag, size = 0x8, scoped, tag = 'scoped memory for cbam_pallas.1']
    %10 = vsyncpa [#allocation3], 0
    %s11 = scalar_lea.sflag [#allocation3], 1
    %12 = vsyncpa %s11, 0
    loop: start=0, step=1, limit=4
    $region2: #{cbam_pallas.1} parent=1 // loop_pre_header
      _
    $region3: #{cbam_pallas.1} parent=1 // loop_header
      %s14 = sphi 0, %s18
      %p15 = scmp.ge.s32.totalorder %s14, 4
      %s24 = sphi 0, %s26
      %s27 = sphi 0, %s24
      %s28 = sphi 0, %s27
      %s44 = sphi 0, %s28
      %s48 = sphi 0, %s48
      %s50 = sphi 0, %s48
      %s51 = sphi 0, %s50
      %s65 = sphi 0, %s51
      %s69 = sphi 0, %s69
      %s71 = sphi 0, %s69
      %s72 = sphi 0, %s71
      %s86 = sphi 0, %s72
      %s90 = sphi 0, %s90
      %s92 = sphi 0, %s90
      %s93 = sphi 0, %s92
      %s107 = sphi 0, %s93
      %s111 = sphi 0, %s111
      %s113 = sphi 0, %s111
      %s114 = sphi 0, %s113
      %s128 = sphi 0, %s114
      %s134 = sphi 0, %s136
      %s137 = sphi 0, %s134
      %s138 = sphi 0, %s137
      %s154 = sphi 0, %s138
    $region4: #{cbam_pallas.1} parent=1 // loop_header_branch
      %17 = sbr.rel (%p15) target = $region8
    $region5: #{cbam_pallas.1} parent=1 // loop_body
      %s19 = ssub.s32 %s14, 1
      %s20 = ssub.s32 %s14, 2
      %s21 = sadd.s32 %s14, 1
      %s22 = ssub.s32 %s14, %s21
      %p23 = scmp.eq.s32.totalorder %s22, 0
      %s25 = sadd.s32 %s24, 1
      %s26 = scalar_select %p23, %s24, %s25
      %p29 = pneg %p23
      %p30 = scmp.eq.s32.totalorder %s14, 1
      %p31 = por %p29, %p30
      %p32 = scmp.ne.s32.totalorder %s24, %s27
      %p33 = scmp.eq.s32.totalorder %s14, 0
      %p34 = por %p32, %p33
      %p35 = scmp.ne.s32.totalorder %s24, %s27
      %p36 = scmp.eq.s32.totalorder %s19, 1
      %p37 = por %p35, %p36
      %p38 = scmp.ne.s32.totalorder %s27, %s28
      %p39 = scmp.eq.s32.totalorder %s19, 0
      %p40 = por %p38, %p39
      %p41 = scmp.ne.s32.totalorder %s27, %s28
      %p42 = scmp.eq.s32.totalorder %s20, 1
      %p43 = por %p41, %p42
      %p45 = scmp.ne.s32.totalorder %s28, %s44
      %p46 = scmp.eq.s32.totalorder %s20, 0
      %p47 = por %p45, %p46
      %s49 = sadd.s32 %s48, 1
      %p52 = scmp.eq.s32.totalorder %s14, 1
      %p53 = scmp.ne.s32.totalorder %s48, %s50
      %p54 = scmp.eq.s32.totalorder %s14, 0
      %p55 = por %p53, %p54
      %p56 = scmp.ne.s32.totalorder %s48, %s50
      %p57 = scmp.eq.s32.totalorder %s19, 1
      %p58 = por %p56, %p57
      %p59 = scmp.ne.s32.totalorder %s50, %s51
      %p60 = scmp.eq.s32.totalorder %s19, 0
      %p61 = por %p59, %p60
      %p62 = scmp.ne.s32.totalorder %s50, %s51
      %p63 = scmp.eq.s32.totalorder %s20, 1
      %p64 = por %p62, %p63
      %p66 = scmp.ne.s32.totalorder %s51, %s65
      %p67 = scmp.eq.s32.totalorder %s20, 0
      %p68 = por %p66, %p67
      %s70 = sadd.s32 %s69, 1
      %p73 = scmp.eq.s32.totalorder %s14, 1
      %p74 = scmp.ne.s32.totalorder %s69, %s71
      %p75 = scmp.eq.s32.totalorder %s14, 0
      %p76 = por %p74, %p75
      %p77 = scmp.ne.s32.totalorder %s69, %s71
      %p78 = scmp.eq.s32.totalorder %s19, 1
      %p79 = por %p77, %p78
      %p80 = scmp.ne.s32.totalorder %s71, %s72
      %p81 = scmp.eq.s32.totalorder %s19, 0
      %p82 = por %p80, %p81
      %p83 = scmp.ne.s32.totalorder %s71, %s72
      %p84 = scmp.eq.s32.totalorder %s20, 1
      %p85 = por %p83, %p84
      %p87 = scmp.ne.s32.totalorder %s72, %s86
      %p88 = scmp.eq.s32.totalorder %s20, 0
      %p89 = por %p87, %p88
      %s91 = sadd.s32 %s90, 1
      %p94 = scmp.eq.s32.totalorder %s14, 1
      %p95 = scmp.ne.s32.totalorder %s90, %s92
      %p96 = scmp.eq.s32.totalorder %s14, 0
      %p97 = por %p95, %p96
      %p98 = scmp.ne.s32.totalorder %s90, %s92
      %p99 = scmp.eq.s32.totalorder %s19, 1
      %p100 = por %p98, %p99
      %p101 = scmp.ne.s32.totalorder %s92, %s93
      %p102 = scmp.eq.s32.totalorder %s19, 0
      %p103 = por %p101, %p102
      %p104 = scmp.ne.s32.totalorder %s92, %s93
      %p105 = scmp.eq.s32.totalorder %s20, 1
      %p106 = por %p104, %p105
      %p108 = scmp.ne.s32.totalorder %s93, %s107
      %p109 = scmp.eq.s32.totalorder %s20, 0
      %p110 = por %p108, %p109
      %s112 = sadd.s32 %s111, 1
      %p115 = scmp.eq.s32.totalorder %s14, 1
      %p116 = scmp.ne.s32.totalorder %s111, %s113
      %p117 = scmp.eq.s32.totalorder %s14, 0
      %p118 = por %p116, %p117
      %p119 = scmp.ne.s32.totalorder %s111, %s113
      %p120 = scmp.eq.s32.totalorder %s19, 1
      %p121 = por %p119, %p120
      %p122 = scmp.ne.s32.totalorder %s113, %s114
      %p123 = scmp.eq.s32.totalorder %s19, 0
      %p124 = por %p122, %p123
      %p125 = scmp.ne.s32.totalorder %s113, %s114
      %p126 = scmp.eq.s32.totalorder %s20, 1
      %p127 = por %p125, %p126
      %p129 = scmp.ne.s32.totalorder %s114, %s128
      %p130 = scmp.eq.s32.totalorder %s20, 0
      %p131 = por %p129, %p130
      %s132 = ssub.s32 %s14, %s21
      %p133 = scmp.eq.s32.totalorder %s132, 0
      %s135 = sadd.s32 %s134, 1
      %s136 = scalar_select %p133, %s134, %s135
      %p139 = pneg %p133
      %p140 = scmp.eq.s32.totalorder %s14, 1
      %p141 = por %p139, %p140
      %p142 = scmp.ne.s32.totalorder %s134, %s137
      %p143 = scmp.eq.s32.totalorder %s14, 0
      %p144 = por %p142, %p143
      %p145 = scmp.ne.s32.totalorder %s134, %s137
      %p146 = scmp.eq.s32.totalorder %s19, 1
      %p147 = por %p145, %p146
      %p148 = scmp.ne.s32.totalorder %s137, %s138
      %p149 = scmp.eq.s32.totalorder %s19, 0
      %p150 = por %p148, %p149
      %p151 = scmp.ne.s32.totalorder %s137, %s138
      %p152 = scmp.eq.s32.totalorder %s20, 1
      %p153 = por %p151, %p152
      %p155 = scmp.ne.s32.totalorder %s138, %s154
      %p156 = scmp.eq.s32.totalorder %s20, 0
      %p157 = por %p155, %p156
      %p158 = scmp.le.s32.totalorder 1, %s14
      %p159 = scmp.lt.s32.totalorder %s14, 3
      %p160 = pnand %p158, %p159
      %p161 = pneg %p160
      // Predicated region
      $region9: #{cbam_pallas.1} parent=5 // pred_check
        _
      $region10: #{cbam_pallas.1} parent=5 // pred_check_branch
        %163 = sbr.rel (%p160) target = $region12
      $region11: #{cbam_pallas.1} parent=5 // pred_region
        %s164 = ssub.s32 %s14, 1
        // Predicated region
        $region13: #{cbam_pallas.1} parent=11 // pred_check
          %p165 = pneg %p61
        $region14: #{cbam_pallas.1} parent=11 // pred_check_branch
          %167 = sbr.rel (%p165) target = $region16
        $region15: #{cbam_pallas.1} parent=11 // pred_region
          _
        $region16: #{cbam_pallas.1} parent=11 // pred_fallthru
          _
        // Predicated region
        $region17: #{cbam_pallas.1} parent=11 // pred_check
          %p168 = pneg %p82
        $region18: #{cbam_pallas.1} parent=11 // pred_check_branch
          %170 = sbr.rel (%p168) target = $region20
        $region19: #{cbam_pallas.1} parent=11 // pred_region
          _
        $region20: #{cbam_pallas.1} parent=11 // pred_fallthru
          _
        // Predicated region
        $region21: #{cbam_pallas.1} parent=11 // pred_check
          %p171 = pneg %p103
        $region22: #{cbam_pallas.1} parent=11 // pred_check_branch
          %173 = sbr.rel (%p171) target = $region24
        $region23: #{cbam_pallas.1} parent=11 // pred_region
          _
        $region24: #{cbam_pallas.1} parent=11 // pred_fallthru
          _
        // Predicated region
        $region25: #{cbam_pallas.1} parent=11 // pred_check
          %p174 = pneg %p124
        $region26: #{cbam_pallas.1} parent=11 // pred_check_branch
          %176 = sbr.rel (%p174) target = $region28
        $region27: #{cbam_pallas.1} parent=11 // pred_region
          _
        $region28: #{cbam_pallas.1} parent=11 // pred_fallthru
          _
      $region12: #{cbam_pallas.1} parent=5 // pred_fallthru
        _
      %p177 = scmp.lt.s32.totalorder %s14, 2
      // Predicated region
      $region29: #{cbam_pallas.1} parent=5 // pred_check
        %p178 = pneg %p177
      $region30: #{cbam_pallas.1} parent=5 // pred_check_branch
        %180 = sbr.rel (%p178) target = $region32
      $region31: #{cbam_pallas.1} parent=5 // pred_region
        // Predicated region
        $region33: #{cbam_pallas.1} parent=31 // pred_check
          %p181 = pneg %p34
        $region34: #{cbam_pallas.1} parent=31 // pred_check_branch
          %183 = sbr.rel (%p181) target = $region36
        $region35: #{cbam_pallas.1} parent=31 // pred_region
          %p184 = scmp.lt.s32.totalorder %s14, 1
          %s185 = scalar_select %p184, %s14, 1
          %s186 = smul.addr %s185, 32
          %s187 = smul.addr %s186, 8
          %s188 = scalar_lea.vmem %s0, %s187
        $region36: #{cbam_pallas.1} parent=31 // pred_fallthru
          _
      $region32: #{cbam_pallas.1} parent=5 // pred_fallthru
        _
      %p189 = scmp.le.s32.totalorder 1, %s14
      %p190 = scmp.lt.s32.totalorder %s14, 3
      %p191 = pnand %p189, %p190
      %p192 = pneg %p191
      // Predicated region
      $region37: #{cbam_pallas.1} parent=5 // pred_check
        _
      $region38: #{cbam_pallas.1} parent=5 // pred_check_branch
        %194 = sbr.rel (%p191) target = $region40
      $region39: #{cbam_pallas.1} parent=5 // pred_region
        %s195 = ssub.s32 %s14, 1
        %p196 = scmp.lt.s32.totalorder %s19, 1
        %s197 = scalar_select %p196, %s19, 1
        %s198 = smul.addr %s197, 32
        %s199 = smul.addr %s198, 8
        %s200 = scalar_lea.vmem %s0, %s199
        %p201 = pneg %p40
        %p202 = pneg %p37
        %p203 = pneg %p61
        %p204 = pneg %p58
        %p205 = pneg %p82
        %p206 = pneg %p79
        %p207 = pneg %p103
        %p208 = pneg %p100
        %p209 = pneg %p124
        %p210 = pneg %p121
        %p211 = pneg %p150
        %p212 = pneg %p147
        %s213 = sand.u32 %s137, 1
        %s214 = scalar_lea.sflag [#allocation3], %s213
        %s215 = sand.u32 %s137, 1
        %s216 = smul.addr %s215, 256
        %s217 = scalar_lea.vmem [#allocation2], %s216
        %p218 = scmp.lt.s32.totalorder %s19, 1
        %s219 = scalar_select %p218, %s19, 1
        %s220 = smul.addr %s219, 32
        %s221 = smul.addr %s220, 8
        %s222 = scalar_lea.vmem %s0, %s221
        %v223 = vld [vmem:[%s222] sm:$0xff]
        %v224 = vld [vmem:[%s222 + $0x8] sm:$0xff]
        %v225 = vld [vmem:[%s222 + $0x10] sm:$0xff]
        %v226 = vld [vmem:[%s222 + $0x18] sm:$0xff]
        %v227 = vld [vmem:[%s222 + $0x20] sm:$0xff]
        %v228 = vld [vmem:[%s222 + $0x28] sm:$0xff]
        %v229 = vld [vmem:[%s222 + $0x30] sm:$0xff]
        %v230 = vld [vmem:[%s222 + $0x38] sm:$0xff]
        %v231 = vld [vmem:[%s222 + $0x40] sm:$0xff]
        %v232 = vld [vmem:[%s222 + $0x48] sm:$0xff]
        %v233 = vld [vmem:[%s222 + $0x50] sm:$0xff]
        %v234 = vld [vmem:[%s222 + $0x58] sm:$0xff]
        %v235 = vld [vmem:[%s222 + $0x60] sm:$0xff]
        %v236 = vld [vmem:[%s222 + $0x68] sm:$0xff]
        %v237 = vld [vmem:[%s222 + $0x70] sm:$0xff]
        %v238 = vld [vmem:[%s222 + $0x78] sm:$0xff]
        %v239 = vld [vmem:[%s222 + $0x80] sm:$0xff]
        %v240 = vld [vmem:[%s222 + $0x88] sm:$0xff]
        %v241 = vld [vmem:[%s222 + $0x90] sm:$0xff]
        %v242 = vld [vmem:[%s222 + $0x98] sm:$0xff]
        %v243 = vld [vmem:[%s222 + $0xa0] sm:$0xff]
        %v244 = vld [vmem:[%s222 + $0xa8] sm:$0xff]
        %v245 = vld [vmem:[%s222 + $0xb0] sm:$0xff]
        %v246 = vld [vmem:[%s222 + $0xb8] sm:$0xff]
        %v247 = vld [vmem:[%s222 + $0xc0] sm:$0xff]
        %v248 = vld [vmem:[%s222 + $0xc8] sm:$0xff]
        %v249 = vld [vmem:[%s222 + $0xd0] sm:$0xff]
        %v250 = vld [vmem:[%s222 + $0xd8] sm:$0xff]
        %v251 = vld [vmem:[%s222 + $0xe0] sm:$0xff]
        %v252 = vld [vmem:[%s222 + $0xe8] sm:$0xff]
        %v253 = vld [vmem:[%s222 + $0xf0] sm:$0xff]
        %v254 = vld [vmem:[%s222 + $0xf8] sm:$0xff]
        %v255 = vadd.f32 %v223, %v224
        %v256 = vadd.f32 %v255, %v225
        %v257 = vadd.f32 %v256, %v226
        %v258 = vadd.f32 %v257, %v227
        %v259 = vadd.f32 %v258, %v228
        %v260 = vadd.f32 %v259, %v229
        %v261 = vadd.f32 %v260, %v230
        %v262 = vadd.f32 %v261, %v231
        %v263 = vadd.f32 %v262, %v232
        %v264 = vadd.f32 %v263, %v233
        %v265 = vadd.f32 %v264, %v234
        %v266 = vadd.f32 %v265, %v235
        %v267 = vadd.f32 %v266, %v236
        %v268 = vadd.f32 %v267, %v237
        %v269 = vadd.f32 %v268, %v238
        %v270 = vadd.f32 %v269, %v239
        %v271 = vadd.f32 %v270, %v240
        %v272 = vadd.f32 %v271, %v241
        %v273 = vadd.f32 %v272, %v242
        %v274 = vadd.f32 %v273, %v243
        %v275 = vadd.f32 %v274, %v244
        %v276 = vadd.f32 %v275, %v245
        %v277 = vadd.f32 %v276, %v246
        %v278 = vadd.f32 %v277, %v247
        %v279 = vadd.f32 %v278, %v248
        %v280 = vadd.f32 %v279, %v249
        %v281 = vadd.f32 %v280, %v250
        %v282 = vadd.f32 %v281, %v251
        %v283 = vadd.f32 %v282, %v252
        %v284 = vadd.f32 %v283, %v253
        %v285 = vadd.f32 %v284, %v254
        %v286 = vrot.slane %v285, 4
        %v287 = vadd.f32 %v285, %v286
        %v288 = vrot.slane %v287, 2
        %v289 = vadd.f32 %v287, %v288
        %v290 = vrot.slane %v289, 1
        %v291 = vadd.f32 %v289, %v290
        %v292 = vrcp.pop 256.0
        %v293 = vmul.f32 %v291, %v292
        %v294 = vmax.f32 %v223, %v227
        %v295 = vmax.f32 %v224, %v228
        %v296 = vmax.f32 %v225, %v229
        %v297 = vmax.f32 %v226, %v230
        %v298 = vmax.f32 %v294, %v231
        %v299 = vmax.f32 %v295, %v232
        %v300 = vmax.f32 %v296, %v233
        %v301 = vmax.f32 %v297, %v234
        %v302 = vmax.f32 %v298, %v235
        %v303 = vmax.f32 %v299, %v236
        %v304 = vmax.f32 %v300, %v237
        %v305 = vmax.f32 %v301, %v238
        %v306 = vmax.f32 %v302, %v239
        %v307 = vmax.f32 %v303, %v240
        %v308 = vmax.f32 %v304, %v241
        %v309 = vmax.f32 %v305, %v242
        %v310 = vmax.f32 %v306, %v243
        %v311 = vmax.f32 %v307, %v244
        %v312 = vmax.f32 %v308, %v245
        %v313 = vmax.f32 %v309, %v246
        %v314 = vmax.f32 %v310, %v247
        %v315 = vmax.f32 %v311, %v248
        %v316 = vmax.f32 %v312, %v249
        %v317 = vmax.f32 %v313, %v250
        %v318 = vmax.f32 %v314, %v251
        %v319 = vmax.f32 %v315, %v252
        %v320 = vmax.f32 %v316, %v253
        %v321 = vmax.f32 %v317, %v254
        %v322 = vmax.f32 %v318, %v319
        %v323 = vmax.f32 %v320, %v321
        %v324 = vmax.f32 %v322, %v323
        %v325 = vrot.slane %v324, 4
        %v326 = vmax.f32 %v324, %v325
        %v327 = vrot.slane %v326, 2
        %v328 = vmax.f32 %v326, %v327
        %v329 = vrot.slane %v328, 1
        %v330 = vmax.f32 %v328, %v329
        %v331 = vld [vmem:[%s1] sm:$0xff]
        %v332 = vld [vmem:[%s1 + $0x8] sm:$0xff]
        %v333 = vld [vmem:[%s1 + $0x10] sm:$0xff]
        %v334 = vld [vmem:[%s1 + $0x18] sm:$0xff]
        %v335 = vld [vmem:[%s1 + $0x20] sm:$0xff]
        %v336 = vld [vmem:[%s1 + $0x28] sm:$0xff]
        %v337 = vld [vmem:[%s1 + $0x30] sm:$0xff]
        %v338 = vld [vmem:[%s1 + $0x38] sm:$0xff]
        %v339 = vld [vmem:[%s1 + $0x40] sm:$0xff]
        %v340 = vld [vmem:[%s1 + $0x48] sm:$0xff]
        %v341 = vld [vmem:[%s1 + $0x50] sm:$0xff]
        %v342 = vld [vmem:[%s1 + $0x58] sm:$0xff]
        %v343 = vld [vmem:[%s1 + $0x60] sm:$0xff]
        %v344 = vld [vmem:[%s1 + $0x68] sm:$0xff]
        %v345 = vld [vmem:[%s1 + $0x70] sm:$0xff]
        %v346 = vld [vmem:[%s1 + $0x78] sm:$0xff]
        %347 = vmatprep.subr.mxu0 0.0
        %348 = vmatpush1.msra.mxu0 %v346
        %349 = vmatprep.subr.mxu0 0.0
        %350 = vmatpush1.msra.mxu0 %v345
        %351 = vmatprep.subr.mxu0 0.0
        %352 = vmatpush1.msra.mxu0 %v344
        %353 = vmatprep.subr.mxu0 0.0
        %354 = vmatpush1.msra.mxu0 %v343
        %355 = vmatprep.subr.mxu0 0.0
        %356 = vmatpush1.msra.mxu0 %v342
        %357 = vmatprep.subr.mxu0 0.0
        %358 = vmatpush1.msra.mxu0 %v341
        %359 = vmatprep.subr.mxu0 0.0
        %360 = vmatpush1.msra.mxu0 %v340
        %361 = vmatprep.subr.mxu0 0.0
        %362 = vmatpush1.msra.mxu0 %v339
        %363 = vmatprep.subr.mxu0 0.0
        %364 = vmatpush1.msra.mxu0 %v338
        %365 = vmatprep.subr.mxu0 0.0
        %366 = vmatpush1.msra.mxu0 %v337
        %367 = vmatprep.subr.mxu0 0.0
        %368 = vmatpush1.msra.mxu0 %v336
        %369 = vmatprep.subr.mxu0 0.0
        %370 = vmatpush1.msra.mxu0 %v335
        %371 = vmatprep.subr.mxu0 0.0
        %372 = vmatpush1.msra.mxu0 %v334
        %373 = vmatprep.subr.mxu0 0.0
        %374 = vmatpush1.msra.mxu0 %v333
        %375 = vmatprep.subr.mxu0 0.0
        %376 = vmatpush1.msra.mxu0 %v332
        %377 = vmatprep.subr.mxu0 0.0
        %378 = vmatpush1.msra.mxu0 %v331
        %379 = vmatprep.subr.mxu0 0.0
        %380 = vmatpush2.msra.mxu0 0.0
        %381 = vmatprep.subr.mxu0 0.0
        %382 = vmatpush2.msra.mxu0 0.0
        %383 = vmatprep.subr.mxu0 0.0
        %384 = vmatpush2.msra.mxu0 0.0
        %385 = vmatprep.subr.mxu0 0.0
        %386 = vmatpush2.msra.mxu0 0.0
        %387 = vmatprep.subr.mxu0 0.0
        %388 = vmatpush2.msra.mxu0 0.0
        %389 = vmatprep.subr.mxu0 0.0
        %390 = vmatpush2.msra.mxu0 0.0
        %391 = vmatprep.subr.mxu0 0.0
        %392 = vmatpush2.msra.mxu0 0.0
        %393 = vmatprep.subr.mxu0 0.0
        %394 = vmatpush2.msra.mxu0 0.0
        %395 = vmatprep.subr.mxu0 0.0
        %396 = vmatpush2.msra.mxu0 0.0
        %397 = vmatprep.subr.mxu0 0.0
        %398 = vmatpush2.msra.mxu0 0.0
        %399 = vmatprep.subr.mxu0 0.0
        %400 = vmatpush2.msra.mxu0 0.0
        %401 = vmatprep.subr.mxu0 0.0
        %402 = vmatpush2.msra.mxu0 0.0
        %403 = vmatprep.subr.mxu0 0.0
        %404 = vmatpush2.msra.mxu0 0.0
        %405 = vmatprep.subr.mxu0 0.0
        %406 = vmatpush2.msra.mxu0 0.0
        %407 = vmatprep.subr.mxu0 0.0
        %408 = vmatpush2.msra.mxu0 0.0
        %409 = vmatprep.subr.mxu0 0.0
        %410 = vmatpush2.msra.mxu0 0.0
        %411 = vmatprep.mubr.f32.mxu0 0.0
        %412 = vmatmul.mubr.f32.gmra.mxu0 %v293
        %v413 = vpop.f32.mrf.mxu0
        %v414 = vadd.f32 0.0, %v413
        %v415 = vpop.f32.mrf.mxu0
        %416 = vdwg.mxu0
        %v417 = vmax.f32 %v414, 0.0
        %418 = vmatprep.subr.mxu0 0.0
        %419 = vmatpush1.msra.mxu0 %v346
        %420 = vmatprep.subr.mxu0 0.0
        %421 = vmatpush1.msra.mxu0 %v345
        %422 = vmatprep.subr.mxu0 0.0
        %423 = vmatpush1.msra.mxu0 %v344
        %424 = vmatprep.subr.mxu0 0.0
        %425 = vmatpush1.msra.mxu0 %v343
        %426 = vmatprep.subr.mxu0 0.0
        %427 = vmatpush1.msra.mxu0 %v342
        %428 = vmatprep.subr.mxu0 0.0
        %429 = vmatpush1.msra.mxu0 %v341
        %430 = vmatprep.subr.mxu0 0.0
        %431 = vmatpush1.msra.mxu0 %v340
        %432 = vmatprep.subr.mxu0 0.0
        %433 = vmatpush1.msra.mxu0 %v339
        %434 = vmatprep.subr.mxu0 0.0
        %435 = vmatpush1.msra.mxu0 %v338
        %436 = vmatprep.subr.mxu0 0.0
        %437 = vmatpush1.msra.mxu0 %v337
        %438 = vmatprep.subr.mxu0 0.0
        %439 = vmatpush1.msra.mxu0 %v336
        %440 = vmatprep.subr.mxu0 0.0
        %441 = vmatpush1.msra.mxu0 %v335
        %442 = vmatprep.subr.mxu0 0.0
        %443 = vmatpush1.msra.mxu0 %v334
        %444 = vmatprep.subr.mxu0 0.0
        %445 = vmatpush1.msra.mxu0 %v333
        %446 = vmatprep.subr.mxu0 0.0
        %447 = vmatpush1.msra.mxu0 %v332
        %448 = vmatprep.subr.mxu0 0.0
        %449 = vmatpush1.msra.mxu0 %v331
        %450 = vmatprep.subr.mxu0 0.0
        %451 = vmatpush2.msra.mxu0 0.0
        %452 = vmatprep.subr.mxu0 0.0
        %453 = vmatpush2.msra.mxu0 0.0
        %454 = vmatprep.subr.mxu0 0.0
        %455 = vmatpush2.msra.mxu0 0.0
        %456 = vmatprep.subr.mxu0 0.0
        %457 = vmatpush2.msra.mxu0 0.0
        %458 = vmatprep.subr.mxu0 0.0
        %459 = vmatpush2.msra.mxu0 0.0
        %460 = vmatprep.subr.mxu0 0.0
        %461 = vmatpush2.msra.mxu0 0.0
        %462 = vmatprep.subr.mxu0 0.0
        %463 = vmatpush2.msra.mxu0 0.0
        %464 = vmatprep.subr.mxu0 0.0
        %465 = vmatpush2.msra.mxu0 0.0
        %466 = vmatprep.subr.mxu0 0.0
        %467 = vmatpush2.msra.mxu0 0.0
        %468 = vmatprep.subr.mxu0 0.0
        %469 = vmatpush2.msra.mxu0 0.0
        %470 = vmatprep.subr.mxu0 0.0
        %471 = vmatpush2.msra.mxu0 0.0
        %472 = vmatprep.subr.mxu0 0.0
        %473 = vmatpush2.msra.mxu0 0.0
        %474 = vmatprep.subr.mxu0 0.0
        %475 = vmatpush2.msra.mxu0 0.0
        %476 = vmatprep.subr.mxu0 0.0
        %477 = vmatpush2.msra.mxu0 0.0
        %478 = vmatprep.subr.mxu0 0.0
        %479 = vmatpush2.msra.mxu0 0.0
        %480 = vmatprep.subr.mxu0 0.0
        %481 = vmatpush2.msra.mxu0 0.0
        %482 = vmatprep.mubr.f32.mxu0 0.0
        %483 = vmatmul.mubr.f32.gmra.mxu0 %v330
        %v484 = vpop.f32.mrf.mxu0
        %v485 = vadd.f32 0.0, %v484
        %v486 = vpop.f32.mrf.mxu0
        %487 = vdwg.mxu0
        %v488 = vmax.f32 %v485, 0.0
        %v489 = vadd.f32 %v417, %v488
        %v490 = vld [vmem:[%s2] sm:$0xff]
        %vm491 = vcmask 64512
        %v493 = vsel %vm491, %v489, 0
        %495 = vmatprep.subr.mxu0 0.0
        %496 = vmatpush1.msra.mxu0 0.0
        %497 = vmatprep.subr.mxu0 0.0
        %498 = vmatpush1.msra.mxu0 0.0
        %499 = vmatprep.subr.mxu0 0.0
        %500 = vmatpush1.msra.mxu0 0.0
        %501 = vmatprep.subr.mxu0 0.0
        %502 = vmatpush1.msra.mxu0 0.0
        %503 = vmatprep.subr.mxu0 0.0
        %504 = vmatpush1.msra.mxu0 0.0
        %505 = vmatprep.subr.mxu0 0.0
        %506 = vmatpush1.msra.mxu0 0.0
        %507 = vmatprep.subr.mxu0 0.0
        %508 = vmatpush1.msra.mxu0 0.0
        %509 = vmatprep.subr.mxu0 0.0
        %510 = vmatpush1.msra.mxu0 0.0
        %511 = vmatprep.subr.mxu0 0.0
        %512 = vmatpush1.msra.mxu0 0.0
        %513 = vmatprep.subr.mxu0 0.0
        %514 = vmatpush1.msra.mxu0 0.0
        %515 = vmatprep.subr.mxu0 0.0
        %516 = vmatpush1.msra.mxu0 0.0
        %517 = vmatprep.subr.mxu0 0.0
        %518 = vmatpush1.msra.mxu0 0.0
        %519 = vmatprep.subr.mxu0 0.0
        %520 = vmatpush1.msra.mxu0 0.0
        %521 = vmatprep.subr.mxu0 0.0
        %522 = vmatpush1.msra.mxu0 0.0
        %523 = vmatprep.subr.mxu0 0.0
        %524 = vmatpush1.msra.mxu0 0.0
        %525 = vmatprep.subr.mxu0 0.0
        %526 = vmatpush1.msra.mxu0 %v490
        %527 = vmatprep.subr.mxu0 0.0
        %528 = vmatpush2.msra.mxu0 0.0
        %529 = vmatprep.subr.mxu0 0.0
        %530 = vmatpush2.msra.mxu0 0.0
        %531 = vmatprep.subr.mxu0 0.0
        %532 = vmatpush2.msra.mxu0 0.0
        %533 = vmatprep.subr.mxu0 0.0
        %534 = vmatpush2.msra.mxu0 0.0
        %535 = vmatprep.subr.mxu0 0.0
        %536 = vmatpush2.msra.mxu0 0.0
        %537 = vmatprep.subr.mxu0 0.0
        %538 = vmatpush2.msra.mxu0 0.0
        %539 = vmatprep.subr.mxu0 0.0
        %540 = vmatpush2.msra.mxu0 0.0
        %541 = vmatprep.subr.mxu0 0.0
        %542 = vmatpush2.msra.mxu0 0.0
        %543 = vmatprep.subr.mxu0 0.0
        %544 = vmatpush2.msra.mxu0 0.0
        %545 = vmatprep.subr.mxu0 0.0
        %546 = vmatpush2.msra.mxu0 0.0
        %547 = vmatprep.subr.mxu0 0.0
        %548 = vmatpush2.msra.mxu0 0.0
        %549 = vmatprep.subr.mxu0 0.0
        %550 = vmatpush2.msra.mxu0 0.0
        %551 = vmatprep.subr.mxu0 0.0
        %552 = vmatpush2.msra.mxu0 0.0
        %553 = vmatprep.subr.mxu0 0.0
        %554 = vmatpush2.msra.mxu0 0.0
        %555 = vmatprep.subr.mxu0 0.0
        %556 = vmatpush2.msra.mxu0 0.0
        %557 = vmatprep.subr.mxu0 0.0
        %558 = vmatpush2.msra.mxu0 0.0
        %559 = vmatprep.mubr.f32.mxu0 0.0
        %560 = vmatmul.mubr.f32.gmra.mxu0 %v493
        %v561 = vpop.f32.mrf.mxu0
        %v562 = vadd.f32 0.0, %v561
        %v563 = vpop.f32.mrf.mxu0
        %564 = vdwg.mxu0
        %v565 = vxor.u32 %v562, 2147483648
        %v566 = vmul.f32 %v565, 1.442695
        %v567 = vpow.pop %v566
        %v568 = vadd.f32 %v567, 1.0
        %v569 = vrcp.pop %v568
        %v570 = vmul.f32 1.0, %v569
        %v571 = vlaneseq
        %v572 = vshrl.u32 %v571, 7
        %v573 = vsub.s32 0, %v572
        %v574 = vrot.slane %v570, %v573
        %v575 = vmul.f32 %v223, %v574
        %v576 = vmul.f32 %v224, %v574
        %v577 = vmul.f32 %v225, %v574
        %v578 = vmul.f32 %v226, %v574
        %v579 = vmul.f32 %v227, %v574
        %v580 = vmul.f32 %v228, %v574
        %v581 = vmul.f32 %v229, %v574
        %v582 = vmul.f32 %v230, %v574
        %v583 = vmul.f32 %v231, %v574
        %v584 = vmul.f32 %v232, %v574
        %v585 = vmul.f32 %v233, %v574
        %v586 = vmul.f32 %v234, %v574
        %v587 = vmul.f32 %v235, %v574
        %v588 = vmul.f32 %v236, %v574
        %v589 = vmul.f32 %v237, %v574
        %v590 = vmul.f32 %v238, %v574
        %v591 = vmul.f32 %v239, %v574
        %v592 = vmul.f32 %v240, %v574
        %v593 = vmul.f32 %v241, %v574
        %v594 = vmul.f32 %v242, %v574
        %v595 = vmul.f32 %v243, %v574
        %v596 = vmul.f32 %v244, %v574
        %v597 = vmul.f32 %v245, %v574
        %v598 = vmul.f32 %v246, %v574
        %v599 = vmul.f32 %v247, %v574
        %v600 = vmul.f32 %v248, %v574
        %v601 = vmul.f32 %v249, %v574
        %v602 = vmul.f32 %v250, %v574
        %v603 = vmul.f32 %v251, %v574
        %v604 = vmul.f32 %v252, %v574
        %v605 = vmul.f32 %v253, %v574
        %v606 = vmul.f32 %v254, %v574
        %607 = vmax.xlane.f32.xlu0 %v575
        %v608 = vpop.xlane.xlu0 %607
        %609 = vmax.xlane.f32.xlu0 %v576
        %v610 = vpop.xlane.xlu0 %609
        %611 = vmax.xlane.f32.xlu0 %v577
        %v612 = vpop.xlane.xlu0 %611
        %613 = vmax.xlane.f32.xlu0 %v578
        %v614 = vpop.xlane.xlu0 %613
        %615 = vmax.xlane.f32.xlu0 %v579
        %v616 = vpop.xlane.xlu0 %615
        %617 = vmax.xlane.f32.xlu0 %v580
        %v618 = vpop.xlane.xlu0 %617
        %619 = vmax.xlane.f32.xlu0 %v581
        %v620 = vpop.xlane.xlu0 %619
        %621 = vmax.xlane.f32.xlu0 %v582
        %v622 = vpop.xlane.xlu0 %621
        %623 = vmax.xlane.f32.xlu0 %v583
        %v624 = vpop.xlane.xlu0 %623
        %625 = vmax.xlane.f32.xlu0 %v584
        %v626 = vpop.xlane.xlu0 %625
        %627 = vmax.xlane.f32.xlu0 %v585
        %v628 = vpop.xlane.xlu0 %627
        %629 = vmax.xlane.f32.xlu0 %v586
        %v630 = vpop.xlane.xlu0 %629
        %631 = vmax.xlane.f32.xlu0 %v587
        %v632 = vpop.xlane.xlu0 %631
        %633 = vmax.xlane.f32.xlu0 %v588
        %v634 = vpop.xlane.xlu0 %633
        %635 = vmax.xlane.f32.xlu0 %v589
        %v636 = vpop.xlane.xlu0 %635
        %637 = vmax.xlane.f32.xlu0 %v590
        %v638 = vpop.xlane.xlu0 %637
        %639 = vmax.xlane.f32.xlu0 %v591
        %v640 = vpop.xlane.xlu0 %639
        %641 = vmax.xlane.f32.xlu0 %v592
        %v642 = vpop.xlane.xlu0 %641
        %643 = vmax.xlane.f32.xlu0 %v593
        %v644 = vpop.xlane.xlu0 %643
        %645 = vmax.xlane.f32.xlu0 %v594
        %v646 = vpop.xlane.xlu0 %645
        %647 = vmax.xlane.f32.xlu0 %v595
        %v648 = vpop.xlane.xlu0 %647
        %649 = vmax.xlane.f32.xlu0 %v596
        %v650 = vpop.xlane.xlu0 %649
        %651 = vmax.xlane.f32.xlu0 %v597
        %v652 = vpop.xlane.xlu0 %651
        %653 = vmax.xlane.f32.xlu0 %v598
        %v654 = vpop.xlane.xlu0 %653
        %655 = vmax.xlane.f32.xlu0 %v599
        %v656 = vpop.xlane.xlu0 %655
        %657 = vmax.xlane.f32.xlu0 %v600
        %v658 = vpop.xlane.xlu0 %657
        %659 = vmax.xlane.f32.xlu0 %v601
        %v660 = vpop.xlane.xlu0 %659
        %661 = vmax.xlane.f32.xlu0 %v602
        %v662 = vpop.xlane.xlu0 %661
        %663 = vmax.xlane.f32.xlu0 %v603
        %v664 = vpop.xlane.xlu0 %663
        %665 = vmax.xlane.f32.xlu0 %v604
        %v666 = vpop.xlane.xlu0 %665
        %667 = vmax.xlane.f32.xlu0 %v605
        %v668 = vpop.xlane.xlu0 %667
        %669 = vmax.xlane.f32.xlu0 %v606
        %v670 = vpop.xlane.xlu0 %669
        %671 = vadd.xlane.f32.xlu0 %v575
        %v672 = vpop.xlane.xlu0 %671
        %673 = vadd.xlane.f32.xlu0 %v576
        %v674 = vpop.xlane.xlu0 %673
        %675 = vadd.xlane.f32.xlu0 %v577
        %v676 = vpop.xlane.xlu0 %675
        %677 = vadd.xlane.f32.xlu0 %v578
        %v678 = vpop.xlane.xlu0 %677
        %679 = vadd.xlane.f32.xlu0 %v579
        %v680 = vpop.xlane.xlu0 %679
        %681 = vadd.xlane.f32.xlu0 %v580
        %v682 = vpop.xlane.xlu0 %681
        %683 = vadd.xlane.f32.xlu0 %v581
        %v684 = vpop.xlane.xlu0 %683
        %685 = vadd.xlane.f32.xlu0 %v582
        %v686 = vpop.xlane.xlu0 %685
        %687 = vadd.xlane.f32.xlu0 %v583
        %v688 = vpop.xlane.xlu0 %687
        %689 = vadd.xlane.f32.xlu0 %v584
        %v690 = vpop.xlane.xlu0 %689
        %691 = vadd.xlane.f32.xlu0 %v585
        %v692 = vpop.xlane.xlu0 %691
        %693 = vadd.xlane.f32.xlu0 %v586
        %v694 = vpop.xlane.xlu0 %693
        %695 = vadd.xlane.f32.xlu0 %v587
        %v696 = vpop.xlane.xlu0 %695
        %697 = vadd.xlane.f32.xlu0 %v588
        %v698 = vpop.xlane.xlu0 %697
        %699 = vadd.xlane.f32.xlu0 %v589
        %v700 = vpop.xlane.xlu0 %699
        %701 = vadd.xlane.f32.xlu0 %v590
        %v702 = vpop.xlane.xlu0 %701
        %703 = vadd.xlane.f32.xlu0 %v591
        %v704 = vpop.xlane.xlu0 %703
        %705 = vadd.xlane.f32.xlu0 %v592
        %v706 = vpop.xlane.xlu0 %705
        %707 = vadd.xlane.f32.xlu0 %v593
        %v708 = vpop.xlane.xlu0 %707
        %709 = vadd.xlane.f32.xlu0 %v594
        %v710 = vpop.xlane.xlu0 %709
        %711 = vadd.xlane.f32.xlu0 %v595
        %v712 = vpop.xlane.xlu0 %711
        %713 = vadd.xlane.f32.xlu0 %v596
        %v714 = vpop.xlane.xlu0 %713
        %715 = vadd.xlane.f32.xlu0 %v597
        %v716 = vpop.xlane.xlu0 %715
        %717 = vadd.xlane.f32.xlu0 %v598
        %v718 = vpop.xlane.xlu0 %717
        %719 = vadd.xlane.f32.xlu0 %v599
        %v720 = vpop.xlane.xlu0 %719
        %721 = vadd.xlane.f32.xlu0 %v600
        %v722 = vpop.xlane.xlu0 %721
        %723 = vadd.xlane.f32.xlu0 %v601
        %v724 = vpop.xlane.xlu0 %723
        %725 = vadd.xlane.f32.xlu0 %v602
        %v726 = vpop.xlane.xlu0 %725
        %727 = vadd.xlane.f32.xlu0 %v603
        %v728 = vpop.xlane.xlu0 %727
        %729 = vadd.xlane.f32.xlu0 %v604
        %v730 = vpop.xlane.xlu0 %729
        %731 = vadd.xlane.f32.xlu0 %v605
        %v732 = vpop.xlane.xlu0 %731
        %733 = vadd.xlane.f32.xlu0 %v606
        %v734 = vpop.xlane.xlu0 %733
        %v735 = vrcp.pop 128.0
        %v736 = vmul.f32 %v672, %v735
        %v737 = vmul.f32 %v674, %v735
        %v738 = vmul.f32 %v676, %v735
        %v739 = vmul.f32 %v678, %v735
        %v740 = vmul.f32 %v680, %v735
        %v741 = vmul.f32 %v682, %v735
        %v742 = vmul.f32 %v684, %v735
        %v743 = vmul.f32 %v686, %v735
        %v744 = vmul.f32 %v688, %v735
        %v745 = vmul.f32 %v690, %v735
        %v746 = vmul.f32 %v692, %v735
        %v747 = vmul.f32 %v694, %v735
        %v748 = vmul.f32 %v696, %v735
        %v749 = vmul.f32 %v698, %v735
        %v750 = vmul.f32 %v700, %v735
        %v751 = vmul.f32 %v702, %v735
        %v752 = vmul.f32 %v704, %v735
        %v753 = vmul.f32 %v706, %v735
        %v754 = vmul.f32 %v708, %v735
        %v755 = vmul.f32 %v710, %v735
        %v756 = vmul.f32 %v712, %v735
        %v757 = vmul.f32 %v714, %v735
        %v758 = vmul.f32 %v716, %v735
        %v759 = vmul.f32 %v718, %v735
        %v760 = vmul.f32 %v720, %v735
        %v761 = vmul.f32 %v722, %v735
        %v762 = vmul.f32 %v724, %v735
        %v763 = vmul.f32 %v726, %v735
        %v764 = vmul.f32 %v728, %v735
        %v765 = vmul.f32 %v730, %v735
        %v766 = vmul.f32 %v732, %v735
        %v767 = vmul.f32 %v734, %v735
        %v768 = vld [vmem:[%s3] sm:$0xff]
        %v769 = vld [vmem:[%s3 + $0x8] sm:$0xff]
        %v770 = vld [vmem:[%s3 + $0x10] sm:$0xff]
        %v771 = vld [vmem:[%s3 + $0x18] sm:$0xff]
        %v772 = vld [vmem:[%s3 + $0x20] sm:$0xff]
        %v773 = vld [vmem:[%s3 + $0x28] sm:$0xff]
        %v774 = vld [vmem:[%s3 + $0x30] sm:$0xff]
        %v775 = vld [vmem:[%s3 + $0x38] sm:$0xff]
        %v776 = vld [vmem:[%s3 + $0x40] sm:$0xff]
        %v777 = vld [vmem:[%s3 + $0x48] sm:$0xff]
        %v778 = vld [vmem:[%s3 + $0x50] sm:$0xff]
        %v779 = vld [vmem:[%s3 + $0x58] sm:$0xff]
        %v780 = vld [vmem:[%s3 + $0x60] sm:$0xff]
        %v781 = vld [vmem:[%s3 + $0x68] sm:$0xff]
        %v782 = vld [vmem:[%s3 + $0x70] sm:$0xff]
        %v783 = vld [vmem:[%s3 + $0x78] sm:$0xff]
        %v784 = vld [vmem:[%s3 + $0x80] sm:$0xff]
        %v785 = vld [vmem:[%s3 + $0x88] sm:$0xff]
        %v786 = vld [vmem:[%s3 + $0x90] sm:$0xff]
        %v787 = vld [vmem:[%s3 + $0x98] sm:$0xff]
        %v788 = vld [vmem:[%s3 + $0xa0] sm:$0xff]
        %v789 = vld [vmem:[%s3 + $0xa8] sm:$0xff]
        %v790 = vld [vmem:[%s3 + $0xb0] sm:$0xff]
        %v791 = vld [vmem:[%s3 + $0xb8] sm:$0xff]
        %v792 = vld [vmem:[%s3 + $0xc0] sm:$0xff]
        %v793 = vld [vmem:[%s3 + $0xc8] sm:$0xff]
        %v794 = vld [vmem:[%s3 + $0xd0] sm:$0xff]
        %v795 = vld [vmem:[%s3 + $0xd8] sm:$0xff]
        %v796 = vld [vmem:[%s3 + $0xe0] sm:$0xff]
        %v797 = vld [vmem:[%s3 + $0xe8] sm:$0xff]
        %v798 = vld [vmem:[%s3 + $0xf0] sm:$0xff]
        %v799 = vld [vmem:[%s3 + $0xf8] sm:$0xff]
        %v800 = vld [vmem:[%s3 + $0x100] sm:$0xff]
        %v801 = vld [vmem:[%s3 + $0x108] sm:$0xff]
        %v802 = vld [vmem:[%s3 + $0x110] sm:$0xff]
        %v803 = vld [vmem:[%s3 + $0x118] sm:$0xff]
        %v804 = vld [vmem:[%s3 + $0x120] sm:$0xff]
        %v805 = vld [vmem:[%s3 + $0x128] sm:$0xff]
        %v806 = vld [vmem:[%s3 + $0x130] sm:$0xff]
        %v807 = vld [vmem:[%s3 + $0x138] sm:$0xff]
        %v808 = vld [vmem:[%s3 + $0x140] sm:$0xff]
        %v809 = vld [vmem:[%s3 + $0x148] sm:$0xff]
        %v810 = vld [vmem:[%s3 + $0x150] sm:$0xff]
        %v811 = vld [vmem:[%s3 + $0x158] sm:$0xff]
        %v812 = vld [vmem:[%s3 + $0x160] sm:$0xff]
        %v813 = vld [vmem:[%s3 + $0x168] sm:$0xff]
        %v814 = vld [vmem:[%s3 + $0x170] sm:$0xff]
        %v815 = vld [vmem:[%s3 + $0x178] sm:$0xff]
        %v816 = vld [vmem:[%s3 + $0x180] sm:$0xff]
        %v817 = vld [vmem:[%s3 + $0x188] sm:$0xff]
        %v818 = vld [vmem:[%s3 + $0x190] sm:$0xff]
        %v819 = vld [vmem:[%s3 + $0x198] sm:$0xff]
        %v820 = vld [vmem:[%s3 + $0x1a0] sm:$0xff]
        %v821 = vld [vmem:[%s3 + $0x1a8] sm:$0xff]
        %v822 = vld [vmem:[%s3 + $0x1b0] sm:$0xff]
        %v823 = vld [vmem:[%s3 + $0x1b8] sm:$0xff]
        %v824 = vld [vmem:[%s3 + $0x1c0] sm:$0xff]
        %v825 = vld [vmem:[%s3 + $0x1c8] sm:$0xff]
        %v826 = vld [vmem:[%s3 + $0x1d0] sm:$0xff]
        %v827 = vld [vmem:[%s3 + $0x1d8] sm:$0xff]
        %v828 = vld [vmem:[%s3 + $0x1e0] sm:$0xff]
        %v829 = vld [vmem:[%s3 + $0x1e8] sm:$0xff]
        %v830 = vld [vmem:[%s3 + $0x1f0] sm:$0xff]
        %v831 = vld [vmem:[%s3 + $0x1f8] sm:$0xff]
        %v832 = vld [vmem:[%s4] sm:$0xff]
        %v833 = vld [vmem:[%s4 + $0x8] sm:$0xff]
        %v834 = vld [vmem:[%s4 + $0x10] sm:$0xff]
        %v835 = vld [vmem:[%s4 + $0x18] sm:$0xff]
        %v836 = vld [vmem:[%s4 + $0x20] sm:$0xff]
        %v837 = vld [vmem:[%s4 + $0x28] sm:$0xff]
        %v838 = vld [vmem:[%s4 + $0x30] sm:$0xff]
        %v839 = vld [vmem:[%s4 + $0x38] sm:$0xff]
        %v840 = vld [vmem:[%s4 + $0x40] sm:$0xff]
        %v841 = vld [vmem:[%s4 + $0x48] sm:$0xff]
        %v842 = vld [vmem:[%s4 + $0x50] sm:$0xff]
        %v843 = vld [vmem:[%s4 + $0x58] sm:$0xff]
        %v844 = vld [vmem:[%s4 + $0x60] sm:$0xff]
        %v845 = vld [vmem:[%s4 + $0x68] sm:$0xff]
        %v846 = vld [vmem:[%s4 + $0x70] sm:$0xff]
        %v847 = vld [vmem:[%s4 + $0x78] sm:$0xff]
        %v848 = vld [vmem:[%s4 + $0x80] sm:$0xff]
        %v849 = vld [vmem:[%s4 + $0x88] sm:$0xff]
        %v850 = vld [vmem:[%s4 + $0x90] sm:$0xff]
        %v851 = vld [vmem:[%s4 + $0x98] sm:$0xff]
        %v852 = vld [vmem:[%s4 + $0xa0] sm:$0xff]
        %v853 = vld [vmem:[%s4 + $0xa8] sm:$0xff]
        %v854 = vld [vmem:[%s4 + $0xb0] sm:$0xff]
        %v855 = vld [vmem:[%s4 + $0xb8] sm:$0xff]
        %v856 = vld [vmem:[%s4 + $0xc0] sm:$0xff]
        %v857 = vld [vmem:[%s4 + $0xc8] sm:$0xff]
        %v858 = vld [vmem:[%s4 + $0xd0] sm:$0xff]
        %v859 = vld [vmem:[%s4 + $0xd8] sm:$0xff]
        %v860 = vld [vmem:[%s4 + $0xe0] sm:$0xff]
        %v861 = vld [vmem:[%s4 + $0xe8] sm:$0xff]
        %v862 = vld [vmem:[%s4 + $0xf0] sm:$0xff]
        %v863 = vld [vmem:[%s4 + $0xf8] sm:$0xff]
        %v864 = vld [vmem:[%s4 + $0x100] sm:$0xff]
        %v865 = vld [vmem:[%s4 + $0x108] sm:$0xff]
        %v866 = vld [vmem:[%s4 + $0x110] sm:$0xff]
        %v867 = vld [vmem:[%s4 + $0x118] sm:$0xff]
        %v868 = vld [vmem:[%s4 + $0x120] sm:$0xff]
        %v869 = vld [vmem:[%s4 + $0x128] sm:$0xff]
        %v870 = vld [vmem:[%s4 + $0x130] sm:$0xff]
        %v871 = vld [vmem:[%s4 + $0x138] sm:$0xff]
        %v872 = vld [vmem:[%s4 + $0x140] sm:$0xff]
        %v873 = vld [vmem:[%s4 + $0x148] sm:$0xff]
        %v874 = vld [vmem:[%s4 + $0x150] sm:$0xff]
        %v875 = vld [vmem:[%s4 + $0x158] sm:$0xff]
        %v876 = vld [vmem:[%s4 + $0x160] sm:$0xff]
        %v877 = vld [vmem:[%s4 + $0x168] sm:$0xff]
        %v878 = vld [vmem:[%s4 + $0x170] sm:$0xff]
        %v879 = vld [vmem:[%s4 + $0x178] sm:$0xff]
        %v880 = vld [vmem:[%s4 + $0x180] sm:$0xff]
        %v881 = vld [vmem:[%s4 + $0x188] sm:$0xff]
        %v882 = vld [vmem:[%s4 + $0x190] sm:$0xff]
        %v883 = vld [vmem:[%s4 + $0x198] sm:$0xff]
        %v884 = vld [vmem:[%s4 + $0x1a0] sm:$0xff]
        %v885 = vld [vmem:[%s4 + $0x1a8] sm:$0xff]
        %v886 = vld [vmem:[%s4 + $0x1b0] sm:$0xff]
        %v887 = vld [vmem:[%s4 + $0x1b8] sm:$0xff]
        %v888 = vld [vmem:[%s4 + $0x1c0] sm:$0xff]
        %v889 = vld [vmem:[%s4 + $0x1c8] sm:$0xff]
        %v890 = vld [vmem:[%s4 + $0x1d0] sm:$0xff]
        %v891 = vld [vmem:[%s4 + $0x1d8] sm:$0xff]
        %v892 = vld [vmem:[%s4 + $0x1e0] sm:$0xff]
        %v893 = vld [vmem:[%s4 + $0x1e8] sm:$0xff]
        %v894 = vld [vmem:[%s4 + $0x1f0] sm:$0xff]
        %v895 = vld [vmem:[%s4 + $0x1f8] sm:$0xff]
        %896 = vmatprep.subr.mxu0 0.0
        %897 = vmatpush1.msra.mxu0 %v751
        %898 = vmatprep.subr.mxu0 0.0
        %899 = vmatpush1.msra.mxu0 %v750
        %900 = vmatprep.subr.mxu0 0.0
        %901 = vmatpush1.msra.mxu0 %v749
        %902 = vmatprep.subr.mxu0 0.0
        %903 = vmatpush1.msra.mxu0 %v748
        %904 = vmatprep.subr.mxu0 0.0
        %905 = vmatpush1.msra.mxu0 %v747
        %906 = vmatprep.subr.mxu0 0.0
        %907 = vmatpush1.msra.mxu0 %v746
        %908 = vmatprep.subr.mxu0 0.0
        %909 = vmatpush1.msra.mxu0 %v745
        %910 = vmatprep.subr.mxu0 0.0
        %911 = vmatpush1.msra.mxu0 %v744
        %912 = vmatprep.subr.mxu0 0.0
        %913 = vmatpush1.msra.mxu0 %v743
        %914 = vmatprep.subr.mxu0 0.0
        %915 = vmatpush1.msra.mxu0 %v742
        %916 = vmatprep.subr.mxu0 0.0
        %917 = vmatpush1.msra.mxu0 %v741
        %918 = vmatprep.subr.mxu0 0.0
        %919 = vmatpush1.msra.mxu0 %v740
        %920 = vmatprep.subr.mxu0 0.0
        %921 = vmatpush1.msra.mxu0 %v739
        %922 = vmatprep.subr.mxu0 0.0
        %923 = vmatpush1.msra.mxu0 %v738
        %924 = vmatprep.subr.mxu0 0.0
        %925 = vmatpush1.msra.mxu0 %v737
        %926 = vmatprep.subr.mxu0 0.0
        %927 = vmatpush1.msra.mxu0 %v736
        %928 = vmatprep.subr.mxu0 0.0
        %929 = vmatpush2.msra.mxu0 %v767
        %930 = vmatprep.subr.mxu0 0.0
        %931 = vmatpush2.msra.mxu0 %v766
        %932 = vmatprep.subr.mxu0 0.0
        %933 = vmatpush2.msra.mxu0 %v765
        %934 = vmatprep.subr.mxu0 0.0
        %935 = vmatpush2.msra.mxu0 %v764
        %936 = vmatprep.subr.mxu0 0.0
        %937 = vmatpush2.msra.mxu0 %v763
        %938 = vmatprep.subr.mxu0 0.0
        %939 = vmatpush2.msra.mxu0 %v762
        %940 = vmatprep.subr.mxu0 0.0
        %941 = vmatpush2.msra.mxu0 %v761
        %942 = vmatprep.subr.mxu0 0.0
        %943 = vmatpush2.msra.mxu0 %v760
        %944 = vmatprep.subr.mxu0 0.0
        %945 = vmatpush2.msra.mxu0 %v759
        %946 = vmatprep.subr.mxu0 0.0
        %947 = vmatpush2.msra.mxu0 %v758
        %948 = vmatprep.subr.mxu0 0.0
        %949 = vmatpush2.msra.mxu0 %v757
        %950 = vmatprep.subr.mxu0 0.0
        %951 = vmatpush2.msra.mxu0 %v756
        %952 = vmatprep.subr.mxu0 0.0
        %953 = vmatpush2.msra.mxu0 %v755
        %954 = vmatprep.subr.mxu0 0.0
        %955 = vmatpush2.msra.mxu0 %v754
        %956 = vmatprep.subr.mxu0 0.0
        %957 = vmatpush2.msra.mxu0 %v753
        %958 = vmatprep.subr.mxu0 0.0
        %959 = vmatpush2.msra.mxu0 %v752
        %960 = vmatprep.mubr.f32.mxu0 %v833
        %961 = vmatmul.mubr.f32.gmra.mxu0 %v832
        %v962 = vpop.f32.mrf.mxu0
        %v963 = vadd.f32 0.0, %v962
        %v964 = vpop.f32.mrf.mxu0
        %965 = vmatprep.mubr.f32.mxu0 %v835
        %966 = vmatmul.mubr.f32.gmra.mxu0 %v834
        %v967 = vpop.f32.mrf.mxu0
        %v968 = vadd.f32 0.0, %v967
        %v969 = vpop.f32.mrf.mxu0
        %970 = vmatprep.mubr.f32.mxu0 %v837
        %971 = vmatmul.mubr.f32.gmra.mxu0 %v836
        %v972 = vpop.f32.mrf.mxu0
        %v973 = vadd.f32 0.0, %v972
        %v974 = vpop.f32.mrf.mxu0
        %975 = vmatprep.mubr.f32.mxu0 %v839
        %976 = vmatmul.mubr.f32.gmra.mxu0 %v838
        %v977 = vpop.f32.mrf.mxu0
        %v978 = vadd.f32 0.0, %v977
        %v979 = vpop.f32.mrf.mxu0
        %980 = vmatprep.mubr.f32.mxu0 %v841
        %981 = vmatmul.mubr.f32.gmra.mxu0 %v840
        %v982 = vpop.f32.mrf.mxu0
        %v983 = vadd.f32 0.0, %v982
        %v984 = vpop.f32.mrf.mxu0
        %985 = vmatprep.mubr.f32.mxu0 %v843
        %986 = vmatmul.mubr.f32.gmra.mxu0 %v842
        %v987 = vpop.f32.mrf.mxu0
        %v988 = vadd.f32 0.0, %v987
        %v989 = vpop.f32.mrf.mxu0
        %990 = vmatprep.mubr.f32.mxu0 %v845
        %991 = vmatmul.mubr.f32.gmra.mxu0 %v844
        %v992 = vpop.f32.mrf.mxu0
        %v993 = vadd.f32 0.0, %v992
        %v994 = vpop.f32.mrf.mxu0
        %995 = vmatprep.mubr.f32.mxu0 %v847
        %996 = vmatmul.mubr.f32.gmra.mxu0 %v846
        %v997 = vpop.f32.mrf.mxu0
        %v998 = vadd.f32 0.0, %v997
        %v999 = vpop.f32.mrf.mxu0
        %1000 = vmatprep.mubr.f32.mxu0 %v849
        %1001 = vmatmul.mubr.f32.gmra.mxu0 %v848
        %v1002 = vpop.f32.mrf.mxu0
        %v1003 = vadd.f32 0.0, %v1002
        %v1004 = vpop.f32.mrf.mxu0
        %1005 = vmatprep.mubr.f32.mxu0 %v851
        %1006 = vmatmul.mubr.f32.gmra.mxu0 %v850
        %v1007 = vpop.f32.mrf.mxu0
        %v1008 = vadd.f32 0.0, %v1007
        %v1009 = vpop.f32.mrf.mxu0
        %1010 = vmatprep.mubr.f32.mxu0 %v853
        %1011 = vmatmul.mubr.f32.gmra.mxu0 %v852
        %v1012 = vpop.f32.mrf.mxu0
        %v1013 = vadd.f32 0.0, %v1012
        %v1014 = vpop.f32.mrf.mxu0
        %1015 = vmatprep.mubr.f32.mxu0 %v855
        %1016 = vmatmul.mubr.f32.gmra.mxu0 %v854
        %v1017 = vpop.f32.mrf.mxu0
        %v1018 = vadd.f32 0.0, %v1017
        %v1019 = vpop.f32.mrf.mxu0
        %1020 = vmatprep.mubr.f32.mxu0 %v857
        %1021 = vmatmul.mubr.f32.gmra.mxu0 %v856
        %v1022 = vpop.f32.mrf.mxu0
        %v1023 = vadd.f32 0.0, %v1022
        %v1024 = vpop.f32.mrf.mxu0
        %1025 = vmatprep.mubr.f32.mxu0 %v859
        %1026 = vmatmul.mubr.f32.gmra.mxu0 %v858
        %v1027 = vpop.f32.mrf.mxu0
        %v1028 = vadd.f32 0.0, %v1027
        %v1029 = vpop.f32.mrf.mxu0
        %1030 = vmatprep.mubr.f32.mxu0 %v861
        %1031 = vmatmul.mubr.f32.gmra.mxu0 %v860
        %v1032 = vpop.f32.mrf.mxu0
        %v1033 = vadd.f32 0.0, %v1032
        %v1034 = vpop.f32.mrf.mxu0
        %1035 = vmatprep.mubr.f32.mxu0 %v863
        %1036 = vmatmul.mubr.f32.gmra.mxu0 %v862
        %v1037 = vpop.f32.mrf.mxu0
        %v1038 = vadd.f32 0.0, %v1037
        %v1039 = vpop.f32.mrf.mxu0
        %1040 = vmatprep.mubr.f32.mxu0 %v865
        %1041 = vmatmul.mubr.f32.gmra.mxu0 %v864
        %v1042 = vpop.f32.mrf.mxu0
        %v1043 = vadd.f32 0.0, %v1042
        %v1044 = vpop.f32.mrf.mxu0
        %1045 = vmatprep.mubr.f32.mxu0 %v867
        %1046 = vmatmul.mubr.f32.gmra.mxu0 %v866
        %v1047 = vpop.f32.mrf.mxu0
        %v1048 = vadd.f32 0.0, %v1047
        %v1049 = vpop.f32.mrf.mxu0
        %1050 = vmatprep.mubr.f32.mxu0 %v869
        %1051 = vmatmul.mubr.f32.gmra.mxu0 %v868
        %v1052 = vpop.f32.mrf.mxu0
        %v1053 = vadd.f32 0.0, %v1052
        %v1054 = vpop.f32.mrf.mxu0
        %1055 = vmatprep.mubr.f32.mxu0 %v871
        %1056 = vmatmul.mubr.f32.gmra.mxu0 %v870
        %v1057 = vpop.f32.mrf.mxu0
        %v1058 = vadd.f32 0.0, %v1057
        %v1059 = vpop.f32.mrf.mxu0
        %1060 = vmatprep.mubr.f32.mxu0 %v873
        %1061 = vmatmul.mubr.f32.gmra.mxu0 %v872
        %v1062 = vpop.f32.mrf.mxu0
        %v1063 = vadd.f32 0.0, %v1062
        %v1064 = vpop.f32.mrf.mxu0
        %1065 = vmatprep.mubr.f32.mxu0 %v875
        %1066 = vmatmul.mubr.f32.gmra.mxu0 %v874
        %v1067 = vpop.f32.mrf.mxu0
        %v1068 = vadd.f32 0.0, %v1067
        %v1069 = vpop.f32.mrf.mxu0
        %1070 = vmatprep.mubr.f32.mxu0 %v877
        %1071 = vmatmul.mubr.f32.gmra.mxu0 %v876
        %v1072 = vpop.f32.mrf.mxu0
        %v1073 = vadd.f32 0.0, %v1072
        %v1074 = vpop.f32.mrf.mxu0
        %1075 = vmatprep.mubr.f32.mxu0 %v879
        %1076 = vmatmul.mubr.f32.gmra.mxu0 %v878
        %v1077 = vpop.f32.mrf.mxu0
        %v1078 = vadd.f32 0.0, %v1077
        %v1079 = vpop.f32.mrf.mxu0
        %1080 = vmatprep.mubr.f32.mxu0 %v881
        %1081 = vmatmul.mubr.f32.gmra.mxu0 %v880
        %v1082 = vpop.f32.mrf.mxu0
        %v1083 = vadd.f32 0.0, %v1082
        %v1084 = vpop.f32.mrf.mxu0
        %1085 = vmatprep.mubr.f32.mxu0 %v883
        %1086 = vmatmul.mubr.f32.gmra.mxu0 %v882
        %v1087 = vpop.f32.mrf.mxu0
        %v1088 = vadd.f32 0.0, %v1087
        %v1089 = vpop.f32.mrf.mxu0
        %1090 = vmatprep.mubr.f32.mxu0 %v885
        %1091 = vmatmul.mubr.f32.gmra.mxu0 %v884
        %v1092 = vpop.f32.mrf.mxu0
        %v1093 = vadd.f32 0.0, %v1092
        %v1094 = vpop.f32.mrf.mxu0
        %1095 = vmatprep.mubr.f32.mxu0 %v887
        %1096 = vmatmul.mubr.f32.gmra.mxu0 %v886
        %v1097 = vpop.f32.mrf.mxu0
        %v1098 = vadd.f32 0.0, %v1097
        %v1099 = vpop.f32.mrf.mxu0
        %1100 = vmatprep.mubr.f32.mxu0 %v889
        %1101 = vmatmul.mubr.f32.gmra.mxu0 %v888
        %v1102 = vpop.f32.mrf.mxu0
        %v1103 = vadd.f32 0.0, %v1102
        %v1104 = vpop.f32.mrf.mxu0
        %1105 = vmatprep.mubr.f32.mxu0 %v891
        %1106 = vmatmul.mubr.f32.gmra.mxu0 %v890
        %v1107 = vpop.f32.mrf.mxu0
        %v1108 = vadd.f32 0.0, %v1107
        %v1109 = vpop.f32.mrf.mxu0
        %1110 = vmatprep.mubr.f32.mxu0 %v893
        %1111 = vmatmul.mubr.f32.gmra.mxu0 %v892
        %v1112 = vpop.f32.mrf.mxu0
        %v1113 = vadd.f32 0.0, %v1112
        %v1114 = vpop.f32.mrf.mxu0
        %1115 = vmatprep.mubr.f32.mxu0 %v895
        %1116 = vmatmul.mubr.f32.gmra.mxu0 %v894
        %v1117 = vpop.f32.mrf.mxu0
        %v1118 = vadd.f32 0.0, %v1117
        %v1119 = vpop.f32.mrf.mxu0
        %1120 = vdwg.mxu0
        %1121 = vmatprep.subr.mxu0 0.0
        %1122 = vmatpush1.msra.mxu0 %v638
        %1123 = vmatprep.subr.mxu0 0.0
        %1124 = vmatpush1.msra.mxu0 %v636
        %1125 = vmatprep.subr.mxu0 0.0
        %1126 = vmatpush1.msra.mxu0 %v634
        %1127 = vmatprep.subr.mxu0 0.0
        %1128 = vmatpush1.msra.mxu0 %v632
        %1129 = vmatprep.subr.mxu0 0.0
        %1130 = vmatpush1.msra.mxu0 %v630
        %1131 = vmatprep.subr.mxu0 0.0
        %1132 = vmatpush1.msra.mxu0 %v628
        %1133 = vmatprep.subr.mxu0 0.0
        %1134 = vmatpush1.msra.mxu0 %v626
        %1135 = vmatprep.subr.mxu0 0.0
        %1136 = vmatpush1.msra.mxu0 %v624
        %1137 = vmatprep.subr.mxu0 0.0
        %1138 = vmatpush1.msra.mxu0 %v622
        %1139 = vmatprep.subr.mxu0 0.0
        %1140 = vmatpush1.msra.mxu0 %v620
        %1141 = vmatprep.subr.mxu0 0.0
        %1142 = vmatpush1.msra.mxu0 %v618
        %1143 = vmatprep.subr.mxu0 0.0
        %1144 = vmatpush1.msra.mxu0 %v616
        %1145 = vmatprep.subr.mxu0 0.0
        %1146 = vmatpush1.msra.mxu0 %v614
        %1147 = vmatprep.subr.mxu0 0.0
        %1148 = vmatpush1.msra.mxu0 %v612
        %1149 = vmatprep.subr.mxu0 0.0
        %1150 = vmatpush1.msra.mxu0 %v610
        %1151 = vmatprep.subr.mxu0 0.0
        %1152 = vmatpush1.msra.mxu0 %v608
        %1153 = vmatprep.subr.mxu0 0.0
        %1154 = vmatpush2.msra.mxu0 %v670
        %1155 = vmatprep.subr.mxu0 0.0
        %1156 = vmatpush2.msra.mxu0 %v668
        %1157 = vmatprep.subr.mxu0 0.0
        %1158 = vmatpush2.msra.mxu0 %v666
        %1159 = vmatprep.subr.mxu0 0.0
        %1160 = vmatpush2.msra.mxu0 %v664
        %1161 = vmatprep.subr.mxu0 0.0
        %1162 = vmatpush2.msra.mxu0 %v662
        %1163 = vmatprep.subr.mxu0 0.0
        %1164 = vmatpush2.msra.mxu0 %v660
        %1165 = vmatprep.subr.mxu0 0.0
        %1166 = vmatpush2.msra.mxu0 %v658
        %1167 = vmatprep.subr.mxu0 0.0
        %1168 = vmatpush2.msra.mxu0 %v656
        %1169 = vmatprep.subr.mxu0 0.0
        %1170 = vmatpush2.msra.mxu0 %v654
        %1171 = vmatprep.subr.mxu0 0.0
        %1172 = vmatpush2.msra.mxu0 %v652
        %1173 = vmatprep.subr.mxu0 0.0
        %1174 = vmatpush2.msra.mxu0 %v650
        %1175 = vmatprep.subr.mxu0 0.0
        %1176 = vmatpush2.msra.mxu0 %v648
        %1177 = vmatprep.subr.mxu0 0.0
        %1178 = vmatpush2.msra.mxu0 %v646
        %1179 = vmatprep.subr.mxu0 0.0
        %1180 = vmatpush2.msra.mxu0 %v644
        %1181 = vmatprep.subr.mxu0 0.0
        %1182 = vmatpush2.msra.mxu0 %v642
        %1183 = vmatprep.subr.mxu0 0.0
        %1184 = vmatpush2.msra.mxu0 %v640
        %1185 = vmatprep.mubr.f32.mxu0 %v769
        %1186 = vmatmul.mubr.f32.gmra.mxu0 %v768
        %v1187 = vpop.f32.mrf.mxu0
        %v1188 = vadd.f32 %v963, %v1187
        %v1189 = vpop.f32.mrf.mxu0
        %1190 = vmatprep.mubr.f32.mxu0 %v771
        %1191 = vmatmul.mubr.f32.gmra.mxu0 %v770
        %v1192 = vpop.f32.mrf.mxu0
        %v1193 = vadd.f32 %v968, %v1192
        %v1194 = vpop.f32.mrf.mxu0
        %1195 = vmatprep.mubr.f32.mxu0 %v773
        %1196 = vmatmul.mubr.f32.gmra.mxu0 %v772
        %v1197 = vpop.f32.mrf.mxu0
        %v1198 = vadd.f32 %v973, %v1197
        %v1199 = vpop.f32.mrf.mxu0
        %1200 = vmatprep.mubr.f32.mxu0 %v775
        %1201 = vmatmul.mubr.f32.gmra.mxu0 %v774
        %v1202 = vpop.f32.mrf.mxu0
        %v1203 = vadd.f32 %v978, %v1202
        %v1204 = vpop.f32.mrf.mxu0
        %1205 = vmatprep.mubr.f32.mxu0 %v777
        %1206 = vmatmul.mubr.f32.gmra.mxu0 %v776
        %v1207 = vpop.f32.mrf.mxu0
        %v1208 = vadd.f32 %v983, %v1207
        %v1209 = vpop.f32.mrf.mxu0
        %1210 = vmatprep.mubr.f32.mxu0 %v779
        %1211 = vmatmul.mubr.f32.gmra.mxu0 %v778
        %v1212 = vpop.f32.mrf.mxu0
        %v1213 = vadd.f32 %v988, %v1212
        %v1214 = vpop.f32.mrf.mxu0
        %1215 = vmatprep.mubr.f32.mxu0 %v781
        %1216 = vmatmul.mubr.f32.gmra.mxu0 %v780
        %v1217 = vpop.f32.mrf.mxu0
        %v1218 = vadd.f32 %v993, %v1217
        %v1219 = vpop.f32.mrf.mxu0
        %1220 = vmatprep.mubr.f32.mxu0 %v783
        %1221 = vmatmul.mubr.f32.gmra.mxu0 %v782
        %v1222 = vpop.f32.mrf.mxu0
        %v1223 = vadd.f32 %v998, %v1222
        %v1224 = vpop.f32.mrf.mxu0
        %1225 = vmatprep.mubr.f32.mxu0 %v785
        %1226 = vmatmul.mubr.f32.gmra.mxu0 %v784
        %v1227 = vpop.f32.mrf.mxu0
        %v1228 = vadd.f32 %v1003, %v1227
        %v1229 = vpop.f32.mrf.mxu0
        %1230 = vmatprep.mubr.f32.mxu0 %v787
        %1231 = vmatmul.mubr.f32.gmra.mxu0 %v786
        %v1232 = vpop.f32.mrf.mxu0
        %v1233 = vadd.f32 %v1008, %v1232
        %v1234 = vpop.f32.mrf.mxu0
        %1235 = vmatprep.mubr.f32.mxu0 %v789
        %1236 = vmatmul.mubr.f32.gmra.mxu0 %v788
        %v1237 = vpop.f32.mrf.mxu0
        %v1238 = vadd.f32 %v1013, %v1237
        %v1239 = vpop.f32.mrf.mxu0
        %1240 = vmatprep.mubr.f32.mxu0 %v791
        %1241 = vmatmul.mubr.f32.gmra.mxu0 %v790
        %v1242 = vpop.f32.mrf.mxu0
        %v1243 = vadd.f32 %v1018, %v1242
        %v1244 = vpop.f32.mrf.mxu0
        %1245 = vmatprep.mubr.f32.mxu0 %v793
        %1246 = vmatmul.mubr.f32.gmra.mxu0 %v792
        %v1247 = vpop.f32.mrf.mxu0
        %v1248 = vadd.f32 %v1023, %v1247
        %v1249 = vpop.f32.mrf.mxu0
        %1250 = vmatprep.mubr.f32.mxu0 %v795
        %1251 = vmatmul.mubr.f32.gmra.mxu0 %v794
        %v1252 = vpop.f32.mrf.mxu0
        %v1253 = vadd.f32 %v1028, %v1252
        %v1254 = vpop.f32.mrf.mxu0
        %1255 = vmatprep.mubr.f32.mxu0 %v797
        %1256 = vmatmul.mubr.f32.gmra.mxu0 %v796
        %v1257 = vpop.f32.mrf.mxu0
        %v1258 = vadd.f32 %v1033, %v1257
        %v1259 = vpop.f32.mrf.mxu0
        %1260 = vmatprep.mubr.f32.mxu0 %v799
        %1261 = vmatmul.mubr.f32.gmra.mxu0 %v798
        %v1262 = vpop.f32.mrf.mxu0
        %v1263 = vadd.f32 %v1038, %v1262
        %v1264 = vpop.f32.mrf.mxu0
        %1265 = vmatprep.mubr.f32.mxu0 %v801
        %1266 = vmatmul.mubr.f32.gmra.mxu0 %v800
        %v1267 = vpop.f32.mrf.mxu0
        %v1268 = vadd.f32 %v1043, %v1267
        %v1269 = vpop.f32.mrf.mxu0
        %1270 = vmatprep.mubr.f32.mxu0 %v803
        %1271 = vmatmul.mubr.f32.gmra.mxu0 %v802
        %v1272 = vpop.f32.mrf.mxu0
        %v1273 = vadd.f32 %v1048, %v1272
        %v1274 = vpop.f32.mrf.mxu0
        %1275 = vmatprep.mubr.f32.mxu0 %v805
        %1276 = vmatmul.mubr.f32.gmra.mxu0 %v804
        %v1277 = vpop.f32.mrf.mxu0
        %v1278 = vadd.f32 %v1053, %v1277
        %v1279 = vpop.f32.mrf.mxu0
        %1280 = vmatprep.mubr.f32.mxu0 %v807
        %1281 = vmatmul.mubr.f32.gmra.mxu0 %v806
        %v1282 = vpop.f32.mrf.mxu0
        %v1283 = vadd.f32 %v1058, %v1282
        %v1284 = vpop.f32.mrf.mxu0
        %1285 = vmatprep.mubr.f32.mxu0 %v809
        %1286 = vmatmul.mubr.f32.gmra.mxu0 %v808
        %v1287 = vpop.f32.mrf.mxu0
        %v1288 = vadd.f32 %v1063, %v1287
        %v1289 = vpop.f32.mrf.mxu0
        %1290 = vmatprep.mubr.f32.mxu0 %v811
        %1291 = vmatmul.mubr.f32.gmra.mxu0 %v810
        %v1292 = vpop.f32.mrf.mxu0
        %v1293 = vadd.f32 %v1068, %v1292
        %v1294 = vpop.f32.mrf.mxu0
        %1295 = vmatprep.mubr.f32.mxu0 %v813
        %1296 = vmatmul.mubr.f32.gmra.mxu0 %v812
        %v1297 = vpop.f32.mrf.mxu0
        %v1298 = vadd.f32 %v1073, %v1297
        %v1299 = vpop.f32.mrf.mxu0
        %1300 = vmatprep.mubr.f32.mxu0 %v815
        %1301 = vmatmul.mubr.f32.gmra.mxu0 %v814
        %v1302 = vpop.f32.mrf.mxu0
        %v1303 = vadd.f32 %v1078, %v1302
        %v1304 = vpop.f32.mrf.mxu0
        %1305 = vmatprep.mubr.f32.mxu0 %v817
        %1306 = vmatmul.mubr.f32.gmra.mxu0 %v816
        %v1307 = vpop.f32.mrf.mxu0
        %v1308 = vadd.f32 %v1083, %v1307
        %v1309 = vpop.f32.mrf.mxu0
        %1310 = vmatprep.mubr.f32.mxu0 %v819
        %1311 = vmatmul.mubr.f32.gmra.mxu0 %v818
        %v1312 = vpop.f32.mrf.mxu0
        %v1313 = vadd.f32 %v1088, %v1312
        %v1314 = vpop.f32.mrf.mxu0
        %1315 = vmatprep.mubr.f32.mxu0 %v821
        %1316 = vmatmul.mubr.f32.gmra.mxu0 %v820
        %v1317 = vpop.f32.mrf.mxu0
        %v1318 = vadd.f32 %v1093, %v1317
        %v1319 = vpop.f32.mrf.mxu0
        %1320 = vmatprep.mubr.f32.mxu0 %v823
        %1321 = vmatmul.mubr.f32.gmra.mxu0 %v822
        %v1322 = vpop.f32.mrf.mxu0
        %v1323 = vadd.f32 %v1098, %v1322
        %v1324 = vpop.f32.mrf.mxu0
        %1325 = vmatprep.mubr.f32.mxu0 %v825
        %1326 = vmatmul.mubr.f32.gmra.mxu0 %v824
        %v1327 = vpop.f32.mrf.mxu0
        %v1328 = vadd.f32 %v1103, %v1327
        %v1329 = vpop.f32.mrf.mxu0
        %1330 = vmatprep.mubr.f32.mxu0 %v827
        %1331 = vmatmul.mubr.f32.gmra.mxu0 %v826
        %v1332 = vpop.f32.mrf.mxu0
        %v1333 = vadd.f32 %v1108, %v1332
        %v1334 = vpop.f32.mrf.mxu0
        %1335 = vmatprep.mubr.f32.mxu0 %v829
        %1336 = vmatmul.mubr.f32.gmra.mxu0 %v828
        %v1337 = vpop.f32.mrf.mxu0
        %v1338 = vadd.f32 %v1113, %v1337
        %v1339 = vpop.f32.mrf.mxu0
        %1340 = vmatprep.mubr.f32.mxu0 %v831
        %1341 = vmatmul.mubr.f32.gmra.mxu0 %v830
        %v1342 = vpop.f32.mrf.mxu0
        %v1343 = vadd.f32 %v1118, %v1342
        %v1344 = vpop.f32.mrf.mxu0
        %1345 = vdwg.mxu0
        %v1346 = vxor.u32 %v1188, 2147483648
        %v1347 = vxor.u32 %v1193, 2147483648
        %v1348 = vxor.u32 %v1198, 2147483648
        %v1349 = vxor.u32 %v1203, 2147483648
        %v1350 = vxor.u32 %v1208, 2147483648
        %v1351 = vxor.u32 %v1213, 2147483648
        %v1352 = vxor.u32 %v1218, 2147483648
        %v1353 = vxor.u32 %v1223, 2147483648
        %v1354 = vxor.u32 %v1228, 2147483648
        %v1355 = vxor.u32 %v1233, 2147483648
        %v1356 = vxor.u32 %v1238, 2147483648
        %v1357 = vxor.u32 %v1243, 2147483648
        %v1358 = vxor.u32 %v1248, 2147483648
        %v1359 = vxor.u32 %v1253, 2147483648
        %v1360 = vxor.u32 %v1258, 2147483648
        %v1361 = vxor.u32 %v1263, 2147483648
        %v1362 = vxor.u32 %v1268, 2147483648
        %v1363 = vxor.u32 %v1273, 2147483648
        %v1364 = vxor.u32 %v1278, 2147483648
        %v1365 = vxor.u32 %v1283, 2147483648
        %v1366 = vxor.u32 %v1288, 2147483648
        %v1367 = vxor.u32 %v1293, 2147483648
        %v1368 = vxor.u32 %v1298, 2147483648
        %v1369 = vxor.u32 %v1303, 2147483648
        %v1370 = vxor.u32 %v1308, 2147483648
        %v1371 = vxor.u32 %v1313, 2147483648
        %v1372 = vxor.u32 %v1318, 2147483648
        %v1373 = vxor.u32 %v1323, 2147483648
        %v1374 = vxor.u32 %v1328, 2147483648
        %v1375 = vxor.u32 %v1333, 2147483648
        %v1376 = vxor.u32 %v1338, 2147483648
        %v1377 = vxor.u32 %v1343, 2147483648
        %v1378 = vmul.f32 %v1346, 1.442695
        %v1379 = vpow.pop %v1378
        %v1380 = vmul.f32 %v1347, 1.442695
        %v1381 = vpow.pop %v1380
        %v1382 = vmul.f32 %v1348, 1.442695
        %v1383 = vpow.pop %v1382
        %v1384 = vmul.f32 %v1349, 1.442695
        %v1385 = vpow.pop %v1384
        %v1386 = vmul.f32 %v1350, 1.442695
        %v1387 = vpow.pop %v1386
        %v1388 = vmul.f32 %v1351, 1.442695
        %v1389 = vpow.pop %v1388
        %v1390 = vmul.f32 %v1352, 1.442695
        %v1391 = vpow.pop %v1390
        %v1392 = vmul.f32 %v1353, 1.442695
        %v1393 = vpow.pop %v1392
        %v1394 = vmul.f32 %v1354, 1.442695
        %v1395 = vpow.pop %v1394
        %v1396 = vmul.f32 %v1355, 1.442695
        %v1397 = vpow.pop %v1396
        %v1398 = vmul.f32 %v1356, 1.442695
        %v1399 = vpow.pop %v1398
        %v1400 = vmul.f32 %v1357, 1.442695
        %v1401 = vpow.pop %v1400
        %v1402 = vmul.f32 %v1358, 1.442695
        %v1403 = vpow.pop %v1402
        %v1404 = vmul.f32 %v1359, 1.442695
        %v1405 = vpow.pop %v1404
        %v1406 = vmul.f32 %v1360, 1.442695
        %v1407 = vpow.pop %v1406
        %v1408 = vmul.f32 %v1361, 1.442695
        %v1409 = vpow.pop %v1408
        %v1410 = vmul.f32 %v1362, 1.442695
        %v1411 = vpow.pop %v1410
        %v1412 = vmul.f32 %v1363, 1.442695
        %v1413 = vpow.pop %v1412
        %v1414 = vmul.f32 %v1364, 1.442695
        %v1415 = vpow.pop %v1414
        %v1416 = vmul.f32 %v1365, 1.442695
        %v1417 = vpow.pop %v1416
        %v1418 = vmul.f32 %v1366, 1.442695
        %v1419 = vpow.pop %v1418
        %v1420 = vmul.f32 %v1367, 1.442695
        %v1421 = vpow.pop %v1420
        %v1422 = vmul.f32 %v1368, 1.442695
        %v1423 = vpow.pop %v1422
        %v1424 = vmul.f32 %v1369, 1.442695
        %v1425 = vpow.pop %v1424
        %v1426 = vmul.f32 %v1370, 1.442695
        %v1427 = vpow.pop %v1426
        %v1428 = vmul.f32 %v1371, 1.442695
        %v1429 = vpow.pop %v1428
        %v1430 = vmul.f32 %v1372, 1.442695
        %v1431 = vpow.pop %v1430
        %v1432 = vmul.f32 %v1373, 1.442695
        %v1433 = vpow.pop %v1432
        %v1434 = vmul.f32 %v1374, 1.442695
        %v1435 = vpow.pop %v1434
        %v1436 = vmul.f32 %v1375, 1.442695
        %v1437 = vpow.pop %v1436
        %v1438 = vmul.f32 %v1376, 1.442695
        %v1439 = vpow.pop %v1438
        %v1440 = vmul.f32 %v1377, 1.442695
        %v1441 = vpow.pop %v1440
        %v1442 = vadd.f32 %v1379, 1.0
        %v1443 = vadd.f32 %v1381, 1.0
        %v1444 = vadd.f32 %v1383, 1.0
        %v1445 = vadd.f32 %v1385, 1.0
        %v1446 = vadd.f32 %v1387, 1.0
        %v1447 = vadd.f32 %v1389, 1.0
        %v1448 = vadd.f32 %v1391, 1.0
        %v1449 = vadd.f32 %v1393, 1.0
        %v1450 = vadd.f32 %v1395, 1.0
        %v1451 = vadd.f32 %v1397, 1.0
        %v1452 = vadd.f32 %v1399, 1.0
        %v1453 = vadd.f32 %v1401, 1.0
        %v1454 = vadd.f32 %v1403, 1.0
        %v1455 = vadd.f32 %v1405, 1.0
        %v1456 = vadd.f32 %v1407, 1.0
        %v1457 = vadd.f32 %v1409, 1.0
        %v1458 = vadd.f32 %v1411, 1.0
        %v1459 = vadd.f32 %v1413, 1.0
        %v1460 = vadd.f32 %v1415, 1.0
        %v1461 = vadd.f32 %v1417, 1.0
        %v1462 = vadd.f32 %v1419, 1.0
        %v1463 = vadd.f32 %v1421, 1.0
        %v1464 = vadd.f32 %v1423, 1.0
        %v1465 = vadd.f32 %v1425, 1.0
        %v1466 = vadd.f32 %v1427, 1.0
        %v1467 = vadd.f32 %v1429, 1.0
        %v1468 = vadd.f32 %v1431, 1.0
        %v1469 = vadd.f32 %v1433, 1.0
        %v1470 = vadd.f32 %v1435, 1.0
        %v1471 = vadd.f32 %v1437, 1.0
        %v1472 = vadd.f32 %v1439, 1.0
        %v1473 = vadd.f32 %v1441, 1.0
        %v1474 = vrcp.pop %v1442
        %v1475 = vmul.f32 1.0, %v1474
        %v1476 = vrcp.pop %v1443
        %v1477 = vmul.f32 1.0, %v1476
        %v1478 = vrcp.pop %v1444
        %v1479 = vmul.f32 1.0, %v1478
        %v1480 = vrcp.pop %v1445
        %v1481 = vmul.f32 1.0, %v1480
        %v1482 = vrcp.pop %v1446
        %v1483 = vmul.f32 1.0, %v1482
        %v1484 = vrcp.pop %v1447
        %v1485 = vmul.f32 1.0, %v1484
        %v1486 = vrcp.pop %v1448
        %v1487 = vmul.f32 1.0, %v1486
        %v1488 = vrcp.pop %v1449
        %v1489 = vmul.f32 1.0, %v1488
        %v1490 = vrcp.pop %v1450
        %v1491 = vmul.f32 1.0, %v1490
        %v1492 = vrcp.pop %v1451
        %v1493 = vmul.f32 1.0, %v1492
        %v1494 = vrcp.pop %v1452
        %v1495 = vmul.f32 1.0, %v1494
        %v1496 = vrcp.pop %v1453
        %v1497 = vmul.f32 1.0, %v1496
        %v1498 = vrcp.pop %v1454
        %v1499 = vmul.f32 1.0, %v1498
        %v1500 = vrcp.pop %v1455
        %v1501 = vmul.f32 1.0, %v1500
        %v1502 = vrcp.pop %v1456
        %v1503 = vmul.f32 1.0, %v1502
        %v1504 = vrcp.pop %v1457
        %v1505 = vmul.f32 1.0, %v1504
        %v1506 = vrcp.pop %v1458
        %v1507 = vmul.f32 1.0, %v1506
        %v1508 = vrcp.pop %v1459
        %v1509 = vmul.f32 1.0, %v1508
        %v1510 = vrcp.pop %v1460
        %v1511 = vmul.f32 1.0, %v1510
        %v1512 = vrcp.pop %v1461
        %v1513 = vmul.f32 1.0, %v1512
        %v1514 = vrcp.pop %v1462
        %v1515 = vmul.f32 1.0, %v1514
        %v1516 = vrcp.pop %v1463
        %v1517 = vmul.f32 1.0, %v1516
        %v1518 = vrcp.pop %v1464
        %v1519 = vmul.f32 1.0, %v1518
        %v1520 = vrcp.pop %v1465
        %v1521 = vmul.f32 1.0, %v1520
        %v1522 = vrcp.pop %v1466
        %v1523 = vmul.f32 1.0, %v1522
        %v1524 = vrcp.pop %v1467
        %v1525 = vmul.f32 1.0, %v1524
        %v1526 = vrcp.pop %v1468
        %v1527 = vmul.f32 1.0, %v1526
        %v1528 = vrcp.pop %v1469
        %v1529 = vmul.f32 1.0, %v1528
        %v1530 = vrcp.pop %v1470
        %v1531 = vmul.f32 1.0, %v1530
        %v1532 = vrcp.pop %v1471
        %v1533 = vmul.f32 1.0, %v1532
        %v1534 = vrcp.pop %v1472
        %v1535 = vmul.f32 1.0, %v1534
        %v1536 = vrcp.pop %v1473
        %v1537 = vmul.f32 1.0, %v1536
        %1539 = vset.pattern.permute.xlu0 0
        %1540 = vperm.xlu0 %1539, %v1475
        %v1541 = vpop.permute.xlu0 %1540
        %1544 = vset.pattern.permute.xlu0 0
        %1545 = vperm.xlu0 %1544, %v1477
        %v1546 = vpop.permute.xlu0 %1545
        %1549 = vset.pattern.permute.xlu0 0
        %1550 = vperm.xlu0 %1549, %v1479
        %v1551 = vpop.permute.xlu0 %1550
        %1554 = vset.pattern.permute.xlu0 0
        %1555 = vperm.xlu0 %1554, %v1481
        %v1556 = vpop.permute.xlu0 %1555
        %1559 = vset.pattern.permute.xlu0 0
        %1560 = vperm.xlu0 %1559, %v1483
        %v1561 = vpop.permute.xlu0 %1560
        %1564 = vset.pattern.permute.xlu0 0
        %1565 = vperm.xlu0 %1564, %v1485
        %v1566 = vpop.permute.xlu0 %1565
        %1569 = vset.pattern.permute.xlu0 0
        %1570 = vperm.xlu0 %1569, %v1487
        %v1571 = vpop.permute.xlu0 %1570
        %1574 = vset.pattern.permute.xlu0 0
        %1575 = vperm.xlu0 %1574, %v1489
        %v1576 = vpop.permute.xlu0 %1575
        %1579 = vset.pattern.permute.xlu0 0
        %1580 = vperm.xlu0 %1579, %v1491
        %v1581 = vpop.permute.xlu0 %1580
        %1584 = vset.pattern.permute.xlu0 0
        %1585 = vperm.xlu0 %1584, %v1493
        %v1586 = vpop.permute.xlu0 %1585
        %1589 = vset.pattern.permute.xlu0 0
        %1590 = vperm.xlu0 %1589, %v1495
        %v1591 = vpop.permute.xlu0 %1590
        %1594 = vset.pattern.permute.xlu0 0
        %1595 = vperm.xlu0 %1594, %v1497
        %v1596 = vpop.permute.xlu0 %1595
        %1599 = vset.pattern.permute.xlu0 0
        %1600 = vperm.xlu0 %1599, %v1499
        %v1601 = vpop.permute.xlu0 %1600
        %1604 = vset.pattern.permute.xlu0 0
        %1605 = vperm.xlu0 %1604, %v1501
        %v1606 = vpop.permute.xlu0 %1605
        %1609 = vset.pattern.permute.xlu0 0
        %1610 = vperm.xlu0 %1609, %v1503
        %v1611 = vpop.permute.xlu0 %1610
        %1614 = vset.pattern.permute.xlu0 0
        %1615 = vperm.xlu0 %1614, %v1505
        %v1616 = vpop.permute.xlu0 %1615
        %1619 = vset.pattern.permute.xlu0 0
        %1620 = vperm.xlu0 %1619, %v1507
        %v1621 = vpop.permute.xlu0 %1620
        %1624 = vset.pattern.permute.xlu0 0
        %1625 = vperm.xlu0 %1624, %v1509
        %v1626 = vpop.permute.xlu0 %1625
        %1629 = vset.pattern.permute.xlu0 0
        %1630 = vperm.xlu0 %1629, %v1511
        %v1631 = vpop.permute.xlu0 %1630
        %1634 = vset.pattern.permute.xlu0 0
        %1635 = vperm.xlu0 %1634, %v1513
        %v1636 = vpop.permute.xlu0 %1635
        %1639 = vset.pattern.permute.xlu0 0
        %1640 = vperm.xlu0 %1639, %v1515
        %v1641 = vpop.permute.xlu0 %1640
        %1644 = vset.pattern.permute.xlu0 0
        %1645 = vperm.xlu0 %1644, %v1517
        %v1646 = vpop.permute.xlu0 %1645
        %1649 = vset.pattern.permute.xlu0 0
        %1650 = vperm.xlu0 %1649, %v1519
        %v1651 = vpop.permute.xlu0 %1650
        %1654 = vset.pattern.permute.xlu0 0
        %1655 = vperm.xlu0 %1654, %v1521
        %v1656 = vpop.permute.xlu0 %1655
        %1659 = vset.pattern.permute.xlu0 0
        %1660 = vperm.xlu0 %1659, %v1523
        %v1661 = vpop.permute.xlu0 %1660
        %1664 = vset.pattern.permute.xlu0 0
        %1665 = vperm.xlu0 %1664, %v1525
        %v1666 = vpop.permute.xlu0 %1665
        %1669 = vset.pattern.permute.xlu0 0
        %1670 = vperm.xlu0 %1669, %v1527
        %v1671 = vpop.permute.xlu0 %1670
        %1674 = vset.pattern.permute.xlu0 0
        %1675 = vperm.xlu0 %1674, %v1529
        %v1676 = vpop.permute.xlu0 %1675
        %1679 = vset.pattern.permute.xlu0 0
        %1680 = vperm.xlu0 %1679, %v1531
        %v1681 = vpop.permute.xlu0 %1680
        %1684 = vset.pattern.permute.xlu0 0
        %1685 = vperm.xlu0 %1684, %v1533
        %v1686 = vpop.permute.xlu0 %1685
        %1689 = vset.pattern.permute.xlu0 0
        %1690 = vperm.xlu0 %1689, %v1535
        %v1691 = vpop.permute.xlu0 %1690
        %1694 = vset.pattern.permute.xlu0 0
        %1695 = vperm.xlu0 %1694, %v1537
        %v1696 = vpop.permute.xlu0 %1695
        %v1698 = vmul.f32 %v575, %v1541
        %v1699 = vmul.f32 %v576, %v1546
        %v1700 = vmul.f32 %v577, %v1551
        %v1701 = vmul.f32 %v578, %v1556
        %v1702 = vmul.f32 %v579, %v1561
        %v1703 = vmul.f32 %v580, %v1566
        %v1704 = vmul.f32 %v581, %v1571
        %v1705 = vmul.f32 %v582, %v1576
        %v1706 = vmul.f32 %v583, %v1581
        %v1707 = vmul.f32 %v584, %v1586
        %v1708 = vmul.f32 %v585, %v1591
        %v1709 = vmul.f32 %v586, %v1596
        %v1710 = vmul.f32 %v587, %v1601
        %v1711 = vmul.f32 %v588, %v1606
        %v1712 = vmul.f32 %v589, %v1611
        %v1713 = vmul.f32 %v590, %v1616
        %v1714 = vmul.f32 %v591, %v1621
        %v1715 = vmul.f32 %v592, %v1626
        %v1716 = vmul.f32 %v593, %v1631
        %v1717 = vmul.f32 %v594, %v1636
        %v1718 = vmul.f32 %v595, %v1641
        %v1719 = vmul.f32 %v596, %v1646
        %v1720 = vmul.f32 %v597, %v1651
        %v1721 = vmul.f32 %v598, %v1656
        %v1722 = vmul.f32 %v599, %v1661
        %v1723 = vmul.f32 %v600, %v1666
        %v1724 = vmul.f32 %v601, %v1671
        %v1725 = vmul.f32 %v602, %v1676
        %v1726 = vmul.f32 %v603, %v1681
        %v1727 = vmul.f32 %v604, %v1686
        %v1728 = vmul.f32 %v605, %v1691
        %v1729 = vmul.f32 %v606, %v1696
        %1730 = vst [vmem:[%s217] sm:$0xff] %v1698
        %1731 = vst [vmem:[%s217 + $0x8] sm:$0xff] %v1699
        %1732 = vst [vmem:[%s217 + $0x10] sm:$0xff] %v1700
        %1733 = vst [vmem:[%s217 + $0x18] sm:$0xff] %v1701
        %1734 = vst [vmem:[%s217 + $0x20] sm:$0xff] %v1702
        %1735 = vst [vmem:[%s217 + $0x28] sm:$0xff] %v1703
        %1736 = vst [vmem:[%s217 + $0x30] sm:$0xff] %v1704
        %1737 = vst [vmem:[%s217 + $0x38] sm:$0xff] %v1705
        %1738 = vst [vmem:[%s217 + $0x40] sm:$0xff] %v1706
        %1739 = vst [vmem:[%s217 + $0x48] sm:$0xff] %v1707
        %1740 = vst [vmem:[%s217 + $0x50] sm:$0xff] %v1708
        %1741 = vst [vmem:[%s217 + $0x58] sm:$0xff] %v1709
        %1742 = vst [vmem:[%s217 + $0x60] sm:$0xff] %v1710
        %1743 = vst [vmem:[%s217 + $0x68] sm:$0xff] %v1711
        %1744 = vst [vmem:[%s217 + $0x70] sm:$0xff] %v1712
        %1745 = vst [vmem:[%s217 + $0x78] sm:$0xff] %v1713
        %1746 = vst [vmem:[%s217 + $0x80] sm:$0xff] %v1714
        %1747 = vst [vmem:[%s217 + $0x88] sm:$0xff] %v1715
        %1748 = vst [vmem:[%s217 + $0x90] sm:$0xff] %v1716
        %1749 = vst [vmem:[%s217 + $0x98] sm:$0xff] %v1717
        %1750 = vst [vmem:[%s217 + $0xa0] sm:$0xff] %v1718
        %1751 = vst [vmem:[%s217 + $0xa8] sm:$0xff] %v1719
        %1752 = vst [vmem:[%s217 + $0xb0] sm:$0xff] %v1720
        %1753 = vst [vmem:[%s217 + $0xb8] sm:$0xff] %v1721
        %1754 = vst [vmem:[%s217 + $0xc0] sm:$0xff] %v1722
        %1755 = vst [vmem:[%s217 + $0xc8] sm:$0xff] %v1723
        %1756 = vst [vmem:[%s217 + $0xd0] sm:$0xff] %v1724
        %1757 = vst [vmem:[%s217 + $0xd8] sm:$0xff] %v1725
        %1758 = vst [vmem:[%s217 + $0xe0] sm:$0xff] %v1726
        %1759 = vst [vmem:[%s217 + $0xe8] sm:$0xff] %v1727
        %1760 = vst [vmem:[%s217 + $0xf0] sm:$0xff] %v1728
        %1761 = vst [vmem:[%s217 + $0xf8] sm:$0xff] %v1729
        %s1762 = sand.u32 %s137, 1
        %s1763 = scalar_lea.sflag [#allocation3], %s1762
        %s1764 = sand.u32 %s137, 1
        %s1765 = smul.addr %s1764, 256
        %s1766 = scalar_lea.vmem [#allocation2], %s1765
        // Predicated region
        $region41: #{cbam_pallas.1} parent=39 // pred_check
          %p1767 = pneg %p147
        $region42: #{cbam_pallas.1} parent=39 // pred_check_branch
          %1769 = sbr.rel (%p1767) target = $region44
        $region43: #{cbam_pallas.1} parent=39 // pred_region
          %s1771 = ssub.s32 4096, 4096
          %1772 = vsyncadd %s1763, %s1771
          %s1773 = smul.addr %s19, 32
          %s1774 = smul.addr %s1773, 128
          %s1775 = scalar_lea.hbm %s5, %s1774
          %s1776 = sshll.u32 %s1766, 4
          %s1777 = int_to_ptr.vmem [resolvable:$true] %s1776
          %1782 = dma.vmem_to_hbm [thread:$0]  %s1777, 4096, %s1775, %s1763, 128, 128, 8
        $region44: #{cbam_pallas.1} parent=39 // pred_fallthru
          _
      $region40: #{cbam_pallas.1} parent=5 // pred_fallthru
        _
      %p1783 = scmp.le.s32.totalorder 2, %s14
      // Predicated region
      $region45: #{cbam_pallas.1} parent=5 // pred_check
        %p1784 = pneg %p1783
      $region46: #{cbam_pallas.1} parent=5 // pred_check_branch
        %1786 = sbr.rel (%p1784) target = $region48
      $region47: #{cbam_pallas.1} parent=5 // pred_region
        %s1787 = ssub.s32 %s14, 2
        // Predicated region
        $region49: #{cbam_pallas.1} parent=47 // pred_check
          %p1788 = pneg %p153
        $region50: #{cbam_pallas.1} parent=47 // pred_check_branch
          %1790 = sbr.rel (%p1788) target = $region52
        $region51: #{cbam_pallas.1} parent=47 // pred_region
          %s1791 = sand.u32 %s138, 1
          %s1792 = scalar_lea.sflag [#allocation3], %s1791
          %s1793 = sand.u32 %s138, 1
          %s1794 = smul.addr %s1793, 256
          %s1795 = scalar_lea.vmem [#allocation2], %s1794
          %1796 = dma.done %s1792, 4096
        $region52: #{cbam_pallas.1} parent=47 // pred_fallthru
          _
      $region48: #{cbam_pallas.1} parent=5 // pred_fallthru
        _
    $region6: #{cbam_pallas.1} parent=1 // loop_footer
      %s18 = sadd.s32 1, %s14
    $region7: #{cbam_pallas.1} parent=1 // loop_footer_branch
      %13 = sbr.rel target = $region3
    $region8: #{cbam_pallas.1} parent=1 // loop_exit
      _
    %1797 = vsyncpa [#allocation3], 1
    %s1798 = scalar_lea.sflag [#allocation3], 1
    %1799 = vsyncpa %s1798, 1

</llo_original>
